<compile_context>
chip_gen: v7x
topology: tpu7x:2x2x1
jax: 0.10.0
libtpu: 0.0.40
codegen_flags: <defaults>
</compile_context>

<pallas_src>
import functools

import jax
import jax.numpy as jnp
from jax import lax
from jax.experimental import pallas as pl
from jax.experimental.pallas import tpu as pltpu


# ----------------------------------------------------------------------------
# Kernel
# ----------------------------------------------------------------------------
def _gnn_kernel(a_in_ref, a_out_ref, h_ref,
                w9_ref, b_hh_ref, c_in_ref, c_out_ref, b_gi_ref,
                out_ref, *, TB, L, E, step, mxu_dtype):
    """One batch tile (TB, L, E) per grid step; runs all `step` GNN iterations.

    E and L here are the padded sizes (E multiple of 128, L multiple of 8).
    """
    M = TB * L
    E3 = 3 * E

    a_in = a_in_ref[...]                      # (TB, L, L)  mxu_dtype
    a_out = a_out_ref[...]                    # (TB, L, L)  mxu_dtype
    w9 = w9_ref[...]                          # (E, 9E) = [P_in | P_out | Whh^T]
    b_hh = b_hh_ref[...]                      # (1, 3E) f32
    c_in = c_in_ref[...]                      # (1, 3E) f32
    c_out = c_out_ref[...]                    # (1, 3E) f32
    b_gi = b_gi_ref[...]                      # (1, 3E) f32

    # ---- loop-invariant terms, computed ONCE (A does not change across steps)
    # Adjacency row sums carry the folded edge biases: A @ (1*b_edge) == rowsum(A)*b.
    rs_in = jnp.sum(a_in.astype(jnp.float32), axis=-1).reshape(M, 1)
    rs_out = jnp.sum(a_out.astype(jnp.float32), axis=-1).reshape(M, 1)
    gi_bias = rs_in * c_in + rs_out * c_out + b_gi          # (M, 3E) f32
    b_hh_b = jnp.broadcast_to(b_hh, (M, E3))                 # hoisted broadcast

    def cell(h2):                              # h2: (M, E) f32
        h2m = h2.astype(mxu_dtype)
        # Single fused hidden-LHS matmul producing [h@P_in | h@P_out | h@Whh^T].
        hw = jnp.dot(h2m, w9, preferred_element_type=jnp.float32)   # (M, 9E)
        hp_in = hw[:, :E3].reshape(TB, L, E3)
        hp_out = hw[:, E3:2 * E3].reshape(TB, L, E3)
        gh = hw[:, 2 * E3:] + b_hh_b                                  # (M, 3E)

        # Graph propagation directly in gate space (N = 3E, lane-dense).
        gi = (jnp.einsum('blk,bke->ble', a_in, hp_in.astype(mxu_dtype),
                         preferred_element_type=jnp.float32)
              + jnp.einsum('blk,bke->ble', a_out, hp_out.astype(mxu_dtype),
                           preferred_element_type=jnp.float32)
              ).reshape(M, E3) + gi_bias                              # (M, 3E)

        reset_gate = jax.nn.sigmoid(gi[:, :E] + gh[:, :E])
        input_gate = jax.nn.sigmoid(gi[:, E:2 * E] + gh[:, E:2 * E])
        new_gate = jnp.tanh(gi[:, 2 * E:] + reset_gate * gh[:, 2 * E:])
        return (1.0 - input_gate) * h2 + input_gate * new_gate

    h2 = h_ref[...].reshape(M, E).astype(jnp.float32)
    h2 = lax.fori_loop(0, step, lambda _, h: cell(h), h2, unroll=True)
    out_ref[...] = h2.reshape(TB, L, E).astype(out_ref.dtype)


# ----------------------------------------------------------------------------
# Hardware queries (robust fallbacks so the wrapper never fails)
# ----------------------------------------------------------------------------
def _num_tensorcores():
    try:
        info = pltpu.get_tpu_info()
        for attr in ("num_cores", "core_count", "num_tensorcores",
                     "tensorcores_per_chip", "cores_per_chip"):
            v = getattr(info, attr, None)
            if isinstance(v, int) and v > 0:
                return v
        cv = getattr(info, "chip_version", None)
        if cv is not None and "7" in str(cv):
            return 2
    except Exception:
        pass
    try:
        kind = (getattr(jax.devices()[0], "device_kind", "") or "").lower()
        if "v7" in kind or "7x" in kind:
            return 2
    except Exception:
        pass
    return 1


def _vmem_capacity_bytes():
    try:
        v = int(pltpu.get_tpu_info().vmem_capacity_bytes)
        if v > 0:
            return v
    except Exception:
        pass
    return 64 * 1024 * 1024        # conservative (v7x per-TC)


def _pick_batch_tile(B, Lp, Ep, mxu_bytes, io_bytes, target_m, vmem_budget,
                     num_tc):
    """Largest TB with TB*Lp >= target_m that fits the VMEM budget; on
    multi-TensorCore chips keep >= 2 grid blocks so megacore sharding has work."""
    tb = min(B, max(1, -(-target_m // Lp)))

    def vmem_est(t):
        m = t * Lp
        a_tiles = 4 * t * Lp * Lp * mxu_bytes          # A_in/A_out, double-buffered
        h_tiles = 4 * t * Lp * Ep * io_bytes           # hidden in + out, double-buffered
        weights = 9 * Ep * Ep * mxu_bytes + 4 * 3 * Ep * 4
        interm = m * (9 * Ep + 4 * 3 * Ep + 6 * Ep) * 4   # live f32 intermediates
        return a_tiles + h_tiles + weights + interm

    while tb > 1 and vmem_est(tb) > vmem_budget:
        tb -= 1
    if num_tc >= 2 and B >= 2 and -(-B // tb) < 2:
        tb = max(1, B // 2)
    return tb


# ----------------------------------------------------------------------------
# Host-side parameter preparation (reassociation + per-gate lane padding)
# ----------------------------------------------------------------------------
def _prep_params(params, E, Ep, mxu_dtype):
    f32 = jnp.float32
    w_ih = params["w_ih"].astype(f32)            # (3E, 2E)
    w_hh = params["w_hh"].astype(f32)            # (3E, E)
    b_ih = params["b_ih"].astype(f32)            # (3E,)
    b_hh = params["b_hh"].astype(f32)            # (3E,)
    b_iah = params["b_iah"].astype(f32)          # (E,)
    b_ioh = params["b_ioh"].astype(f32)          # (E,)
    w_in = params["w_edge_in"].astype(f32)       # (E, E)
    b_in = params["b_edge_in"].astype(f32)       # (E,)
    w_out = params["w_edge_out"].astype(f32)     # (E, E)
    b_out = params["b_edge_out"].astype(f32)     # (E,)

    w_ih_a = w_ih[:, :E].T                       # (E, 3E)
    w_ih_b = w_ih[:, E:].T                       # (E, 3E)

    p_in = w_in.T @ w_ih_a                       # (E, 3E)  W_edge_in^T @ W_ih_a
    p_out = w_out.T @ w_ih_b                     # (E, 3E)
    whh_t = w_hh.T                               # (E, 3E)

    c_in = b_in @ w_ih_a                         # (3E,)
    c_out = b_out @ w_ih_b                       # (3E,)
    b_gi = b_iah @ w_ih_a + b_ioh @ w_ih_b + b_ih

    pe = Ep - E

    def pad_mat(m):      # (E, 3E) -> (Ep, 3Ep): per-gate column pad + row pad
        parts = [jnp.pad(p, ((0, pe), (0, pe))) for p in jnp.split(m, 3, axis=1)]
        return jnp.concatenate(parts, axis=1)

    def pad_vec(v):      # (3E,) -> (1, 3Ep): per-gate pad
        parts = [jnp.pad(p, (0, pe)) for p in jnp.split(v, 3)]
        return jnp.concatenate(parts).reshape(1, 3 * Ep)

    w9 = jnp.concatenate([pad_mat(p_in), pad_mat(p_out), pad_mat(whh_t)],
                         axis=1).astype(mxu_dtype)        # (Ep, 9Ep)
    return (w9, pad_vec(b_hh), pad_vec(c_in), pad_vec(c_out), pad_vec(b_gi))


# ----------------------------------------------------------------------------
# Forward wrapper
# ----------------------------------------------------------------------------
def gnn_forward(A, hidden, params, step=1, *, mxu_dtype=jnp.bfloat16,
                target_m=256):
    """SR-GNN forward. A: (B, L, 2L), hidden: (B, L, E) -> (B, L, E)."""
    B, L, twoL = A.shape
    assert twoL == 2 * L
    E = hidden.shape[-1]
    dtype = hidden.dtype

    Lp = L + (-L) % 8          # sublane-align session length (zero pad, exact)
    Ep = E + (-E) % 128        # lane-align embedding dim (zero pad, exact)

    A_in = A[:, :, :L].astype(mxu_dtype)
    A_out = A[:, :, L:].astype(mxu_dtype)
    if Lp != L:
        A_in = jnp.pad(A_in, ((0, 0), (0, Lp - L), (0, Lp - L)))
        A_out = jnp.pad(A_out, ((0, 0), (0, Lp - L), (0, Lp - L)))
    h_p = hidden
    if Lp != L or Ep != E:
        h_p = jnp.pad(hidden, ((0, 0), (0, Lp - L), (0, Ep - E)))

    w9, b_hh_p, c_in_p, c_out_p, b_gi_p = _prep_params(params, E, Ep, mxu_dtype)

    mxu_bytes = jnp.dtype(mxu_dtype).itemsize
    io_bytes = jnp.dtype(dtype).itemsize
    num_tc = _num_tensorcores()
    vmem_budget = max(32 << 20, int(0.70 * _vmem_capacity_bytes()))

    TB = _pick_batch_tile(B, Lp, Ep, mxu_bytes, io_bytes, target_m,
                          vmem_budget, num_tc)

    # Pad batch to a TB multiple instead of shrinking TB (keeps the MXU M dim).
    Bp = -(-B // TB) * TB
    if Bp != B:
        A_in = jnp.pad(A_in, ((0, Bp - B), (0, 0), (0, 0)))
        A_out = jnp.pad(A_out, ((0, Bp - B), (0, 0), (0, 0)))
        h_p = jnp.pad(h_p, ((0, Bp - B), (0, 0), (0, 0)))

    kernel = functools.partial(_gnn_kernel, TB=TB, L=Lp, E=Ep, step=step,
                               mxu_dtype=mxu_dtype)

    flops = int(Bp * step * (18 * Lp * Ep * Ep + 12 * Lp * Lp * Ep))
    transcendentals = int(Bp * step * 3 * Lp * Ep)
    bytes_accessed = int(2 * Bp * Lp * Lp * mxu_bytes
                         + 2 * Bp * Lp * Ep * io_bytes
                         + 9 * Ep * Ep * mxu_bytes + 4 * 3 * Ep * 4)

    def resident(shape):
        # Whole-array operand with a constant index map: fetched once, stays
        # resident across grid steps.  (pl.Buffered(1) would shave one spare
        # copy of the small slabs from VMEM; left default for portability.)
        return pl.BlockSpec(shape, lambda b: (0,) * len(shape))

    out = pl.pallas_call(
        kernel,
        out_shape=jax.ShapeDtypeStruct((Bp, Lp, Ep), dtype),
        grid_spec=pltpu.PrefetchScalarGridSpec(
            num_scalar_prefetch=0,
            grid=(Bp // TB,),
            in_specs=[
                pl.BlockSpec((TB, Lp, Lp), lambda b: (b, 0, 0)),   # A_in
                pl.BlockSpec((TB, Lp, Lp), lambda b: (b, 0, 0)),   # A_out
                pl.BlockSpec((TB, Lp, Ep), lambda b: (b, 0, 0)),   # hidden
                resident((Ep, 9 * Ep)),                            # fused slab
                resident((1, 3 * Ep)),                             # b_hh
                resident((1, 3 * Ep)),                             # c_in
                resident((1, 3 * Ep)),                             # c_out
                resident((1, 3 * Ep)),                             # b_gi const
            ],
            out_specs=pl.BlockSpec((TB, Lp, Ep), lambda b: (b, 0, 0)),
        ),
        compiler_params=pltpu.CompilerParams(
            dimension_semantics=("parallel",),
            vmem_limit_bytes=vmem_budget),
        cost_estimate=pl.CostEstimate(flops=flops,
                                      transcendentals=transcendentals,
                                      bytes_accessed=bytes_accessed),
    )(A_in, A_out, h_p, w9, b_hh_p, c_in_p, c_out_p, b_gi_p)

    return out[:B, :L, :E]


# ----------------------------------------------------------------------------
# Reference + init (mirrors the PyTorch module)
# ----------------------------------------------------------------------------
def init_params(key, E):
    ks = jax.random.split(key, 10)
    stdv = 1.0 / (E ** 0.5)

    def u(k, shape):
        return jax.random.uniform(k, shape, jnp.float32, -stdv, stdv)

    return {
        "w_ih": u(ks[0], (3 * E, 2 * E)),
        "w_hh": u(ks[1], (3 * E, E)),
        "b_ih": u(ks[2], (3 * E,)),
        "b_hh": u(ks[3], (3 * E,)),
        "b_iah": u(ks[4], (E,)),
        "b_ioh": u(ks[5], (E,)),
        "w_edge_in": u(ks[6], (E, E)),
        "b_edge_in": u(ks[7], (E,)),
        "w_edge_out": u(ks[8], (E, E)),
        "b_edge_out": u(ks[9], (E,)),
    }


def gnn_cell_ref(A, hidden, params):
    """Plain-JAX reference (mirrors the PyTorch GNNCell)."""
    E = hidden.shape[-1]
    L = A.shape[1]
    eh_in = hidden @ params["w_edge_in"].T + params["b_edge_in"]
    eh_out = hidden @ params["w_edge_out"].T + params["b_edge_out"]
    input_in = jnp.matmul(A[:, :, :L], eh_in) + params["b_iah"]
    input_out = jnp.matmul(A[:, :, L:2 * L], eh_out) + params["b_ioh"]
    inputs = jnp.concatenate([input_in, input_out], axis=2)
    gi = inputs @ params["w_ih"].T + params["b_ih"]
    gh = hidden @ params["w_hh"].T + params["b_hh"]
    i_r, i_i, i_n = jnp.split(gi, 3, axis=2)
    h_r, h_i, h_n = jnp.split(gh, 3, axis=2)
    reset_gate = jax.nn.sigmoid(i_r + h_r)
    input_gate = jax.nn.sigmoid(i_i + h_i)
    new_gate = jnp.tanh(i_n + reset_gate * h_n)
    return (1.0 - input_gate) * hidden + input_gate * new_gate


if __name__ == "__main__":
    key = jax.random.PRNGKey(0)

    # (B, L, E): second config exercises L / E / batch padding paths.
    for (B, L, E) in [(2, 8, 32), (4, 5, 48)]:
        k_a, k_h, k_p, key = jax.random.split(key, 4)
        A = jax.random.uniform(k_a, (B, L, 2 * L), jnp.float32)
        hidden = jax.random.normal(k_h, (B, L, E), jnp.float32)
        params = init_params(k_p, E)

        for step in (1, 2):
            ref = hidden
            for _ in range(step):
                ref = gnn_cell_ref(A, ref, params)

            # f32 MXU path: tight check of the reassociated math.
            out_f32 = jax.block_until_ready(
                gnn_forward(A, hidden, params, step=step, mxu_dtype=jnp.float32))
            assert out_f32.shape == (B, L, E)
            err = jnp.max(jnp.abs(out_f32 - ref))
            assert jnp.allclose(out_f32, ref, atol=1e-4, rtol=1e-4), (
                f"f32 mismatch B={B} L={L} E={E} step={step}, max err={err}")

            # Default bf16 MXU path (f32 accumulation + f32 gate math).
            out_bf16 = jax.block_until_ready(
                gnn_forward(A, hidden, params, step=step))
            assert out_bf16.shape == (B, L, E)
            err = jnp.max(jnp.abs(out_bf16 - ref))
            assert jnp.allclose(out_bf16, ref, atol=1e-1, rtol=1e-1), (
                f"bf16 mismatch B={B} L={L} E={E} step={step}, max err={err}")

    print("KERNEL_OK")
</pallas_src>

<mosaic_0001>
module attributes {stable_mosaic.version = 11 : i64} {
  func.func @_gnn_kernel(%arg0: i32, %arg1: memref<2x8x8xf32, #tpu.memory_space<vmem>>, %arg2: memref<2x8x8xf32, #tpu.memory_space<vmem>>, %arg3: memref<2x8x128xf32, #tpu.memory_space<vmem>>, %arg4: memref<128x1152xf32, #tpu.memory_space<vmem>>, %arg5: memref<1x384xf32, #tpu.memory_space<vmem>>, %arg6: memref<1x384xf32, #tpu.memory_space<vmem>>, %arg7: memref<1x384xf32, #tpu.memory_space<vmem>>, %arg8: memref<1x384xf32, #tpu.memory_space<vmem>>, %arg9: memref<2x8x128xf32, #tpu.memory_space<vmem>>) attributes {dimension_semantics = [#tpu.dimension_semantics<parallel>], iteration_bounds = array<i64: 1>, scalar_prefetch = 0 : i64, scratch_operands = 0 : i64, tpu.core_type = #tpu.core_type<tc>, window_params = [{transform_indices = @transform_0, window_bounds = array<i64: 2, 8, 8>}, {transform_indices = @transform_1, window_bounds = array<i64: 2, 8, 8>}, {transform_indices = @transform_2, window_bounds = array<i64: 2, 8, 128>}, {pipeline_mode = #tpu.pipeline_mode<synchronous>, transform_indices = @transform_3, window_bounds = array<i64: 128, 1152>}, {pipeline_mode = #tpu.pipeline_mode<synchronous>, transform_indices = @transform_4, window_bounds = array<i64: 1, 384>}, {pipeline_mode = #tpu.pipeline_mode<synchronous>, transform_indices = @transform_5, window_bounds = array<i64: 1, 384>}, {pipeline_mode = #tpu.pipeline_mode<synchronous>, transform_indices = @transform_6, window_bounds = array<i64: 1, 384>}, {pipeline_mode = #tpu.pipeline_mode<synchronous>, transform_indices = @transform_7, window_bounds = array<i64: 1, 384>}, {transform_indices = @transform_8, window_bounds = array<i64: 2, 8, 128>}]} {
    %c0 = arith.constant 0 : index
    %c0_0 = arith.constant 0 : index
    %c0_1 = arith.constant 0 : index
    %0 = vector.load %arg1[%c0, %c0_0, %c0_1] : memref<2x8x8xf32, #tpu.memory_space<vmem>>, vector<2x8x8xf32>
    %c0_2 = arith.constant 0 : index
    %c0_3 = arith.constant 0 : index
    %c0_4 = arith.constant 0 : index
    %1 = vector.load %arg2[%c0_2, %c0_3, %c0_4] : memref<2x8x8xf32, #tpu.memory_space<vmem>>, vector<2x8x8xf32>
    %c0_5 = arith.constant 0 : index
    %c0_6 = arith.constant 0 : index
    %2 = vector.load %arg4[%c0_5, %c0_6] : memref<128x1152xf32, #tpu.memory_space<vmem>>, vector<128x1152xf32>
    %c0_7 = arith.constant 0 : index
    %c0_8 = arith.constant 0 : index
    %3 = vector.load %arg5[%c0_7, %c0_8] : memref<1x384xf32, #tpu.memory_space<vmem>>, vector<1x384xf32>
    %c0_9 = arith.constant 0 : index
    %c0_10 = arith.constant 0 : index
    %4 = vector.load %arg6[%c0_9, %c0_10] : memref<1x384xf32, #tpu.memory_space<vmem>>, vector<1x384xf32>
    %c0_11 = arith.constant 0 : index
    %c0_12 = arith.constant 0 : index
    %5 = vector.load %arg7[%c0_11, %c0_12] : memref<1x384xf32, #tpu.memory_space<vmem>>, vector<1x384xf32>
    %c0_13 = arith.constant 0 : index
    %c0_14 = arith.constant 0 : index
    %6 = vector.load %arg8[%c0_13, %c0_14] : memref<1x384xf32, #tpu.memory_space<vmem>>, vector<1x384xf32>
    %cst = arith.constant dense<0.000000e+00> : vector<2x8xf32>
    %7 = vector.multi_reduction <add>, %0, %cst [2] : vector<2x8x8xf32> to vector<2x8xf32>
    %8 = vector.shape_cast %7 : vector<2x8xf32> to vector<16x1xf32>
    %cst_15 = arith.constant dense<0.000000e+00> : vector<2x8xf32>
    %9 = vector.multi_reduction <add>, %1, %cst_15 [2] : vector<2x8x8xf32> to vector<2x8xf32>
    %10 = vector.shape_cast %9 : vector<2x8xf32> to vector<16x1xf32>
    %11 = vector.broadcast %8 : vector<16x1xf32> to vector<16x384xf32>
    %12 = vector.broadcast %4 : vector<1x384xf32> to vector<16x384xf32>
    %13 = arith.mulf %11, %12 : vector<16x384xf32>
    %14 = vector.broadcast %10 : vector<16x1xf32> to vector<16x384xf32>
    %15 = vector.broadcast %5 : vector<1x384xf32> to vector<16x384xf32>
    %16 = arith.mulf %14, %15 : vector<16x384xf32>
    %17 = arith.addf %13, %16 : vector<16x384xf32>
    %18 = vector.broadcast %6 : vector<1x384xf32> to vector<16x384xf32>
    %19 = arith.addf %17, %18 : vector<16x384xf32>
    %20 = vector.shape_cast %3 : vector<1x384xf32> to vector<1x384xf32>
    %21 = vector.broadcast %20 : vector<1x384xf32> to vector<16x384xf32>
    %c0_16 = arith.constant 0 : index
    %c0_17 = arith.constant 0 : index
    %c0_18 = arith.constant 0 : index
    %22 = vector.load %arg3[%c0_16, %c0_17, %c0_18] : memref<2x8x128xf32, #tpu.memory_space<vmem>>, vector<2x8x128xf32>
    %23 = vector.shape_cast %22 : vector<2x8x128xf32> to vector<16x128xf32>
    %c0_i32 = arith.constant 0 : i32
    %cst_19 = arith.constant dense<0.000000e+00> : vector<16x1152xf32>
    %24 = tpu.matmul %23, %2, %cst_19 {dimension_numbers = #tpu.dot_dimension_numbers<[1], [0], [0], [1], [0, 0, 1, 1], [], []>} : vector<16x128xf32>, vector<128x1152xf32>, vector<16x1152xf32> -> vector<16x1152xf32>
    %25 = vector.extract_strided_slice %24 {offsets = [0, 0], sizes = [16, 384], strides = [1, 1]} : vector<16x1152xf32> to vector<16x384xf32>
    %26 = vector.shape_cast %25 : vector<16x384xf32> to vector<2x8x384xf32>
    %27 = vector.extract_strided_slice %24 {offsets = [0, 384], sizes = [16, 384], strides = [1, 1]} : vector<16x1152xf32> to vector<16x384xf32>
    %28 = vector.shape_cast %27 : vector<16x384xf32> to vector<2x8x384xf32>
    %29 = vector.extract_strided_slice %24 {offsets = [0, 768], sizes = [16, 384], strides = [1, 1]} : vector<16x1152xf32> to vector<16x384xf32>
    %30 = arith.addf %29, %21 : vector<16x384xf32>
    "tpu.trace_start"() <{level = 10 : i32, message = "blk,bke->ble"}> : () -> ()
    %cst_20 = arith.constant dense<0.000000e+00> : vector<2x8x384xf32>
    %31 = tpu.matmul %0, %26, %cst_20 {dimension_numbers = #tpu.dot_dimension_numbers<[2], [1], [1], [2], [0, 0, 0, 1, 1, 2], [0], [0]>} : vector<2x8x8xf32>, vector<2x8x384xf32>, vector<2x8x384xf32> -> vector<2x8x384xf32>
    %cst_21 = arith.constant dense<0.000000e+00> : vector<2x8x384xf32>
    %32 = tpu.matmul %1, %28, %cst_21 {dimension_numbers = #tpu.dot_dimension_numbers<[2], [1], [1], [2], [0, 0, 0, 1, 1, 2], [0], [0]>} : vector<2x8x8xf32>, vector<2x8x384xf32>, vector<2x8x384xf32> -> vector<2x8x384xf32>
    "tpu.trace_stop"() : () -> ()
    %33 = arith.addf %31, %32 : vector<2x8x384xf32>
    %34 = vector.shape_cast %33 : vector<2x8x384xf32> to vector<16x384xf32>
    %35 = arith.addf %34, %19 : vector<16x384xf32>
    %36 = vector.extract_strided_slice %35 {offsets = [0, 0], sizes = [16, 128], strides = [1, 1]} : vector<16x384xf32> to vector<16x128xf32>
    %37 = vector.extract_strided_slice %30 {offsets = [0, 0], sizes = [16, 128], strides = [1, 1]} : vector<16x384xf32> to vector<16x128xf32>
    %38 = arith.addf %36, %37 : vector<16x128xf32>
    %39 = arith.negf %38 : vector<16x128xf32>
    %40 = math.exp %39 : vector<16x128xf32>
    %cst_22 = arith.constant 1.000000e+00 : f32
    %41 = vector.broadcast %cst_22 : f32 to vector<16x128xf32>
    %42 = arith.addf %41, %40 : vector<16x128xf32>
    %43 = arith.divf %41, %42 : vector<16x128xf32>
    %44 = vector.extract_strided_slice %35 {offsets = [0, 128], sizes = [16, 128], strides = [1, 1]} : vector<16x384xf32> to vector<16x128xf32>
    %45 = vector.extract_strided_slice %30 {offsets = [0, 128], sizes = [16, 128], strides = [1, 1]} : vector<16x384xf32> to vector<16x128xf32>
    %46 = arith.addf %44, %45 : vector<16x128xf32>
    %47 = arith.negf %46 : vector<16x128xf32>
    %48 = math.exp %47 : vector<16x128xf32>
    %cst_23 = arith.constant 1.000000e+00 : f32
    %49 = vector.broadcast %cst_23 : f32 to vector<16x128xf32>
    %50 = arith.addf %49, %48 : vector<16x128xf32>
    %51 = arith.divf %49, %50 : vector<16x128xf32>
    %52 = vector.extract_strided_slice %35 {offsets = [0, 256], sizes = [16, 128], strides = [1, 1]} : vector<16x384xf32> to vector<16x128xf32>
    %53 = vector.extract_strided_slice %30 {offsets = [0, 256], sizes = [16, 128], strides = [1, 1]} : vector<16x384xf32> to vector<16x128xf32>
    %54 = arith.mulf %43, %53 : vector<16x128xf32>
    %55 = arith.addf %52, %54 : vector<16x128xf32>
    %56 = math.tanh %55 : vector<16x128xf32>
    %cst_24 = arith.constant 1.000000e+00 : f32
    %57 = vector.broadcast %cst_24 : f32 to vector<16x128xf32>
    %58 = arith.subf %57, %51 : vector<16x128xf32>
    %59 = arith.mulf %58, %23 : vector<16x128xf32>
    %60 = arith.mulf %51, %56 : vector<16x128xf32>
    %61 = arith.addf %59, %60 : vector<16x128xf32>
    %62 = vector.shape_cast %61 : vector<16x128xf32> to vector<2x8x128xf32>
    %c0_25 = arith.constant 0 : index
    %c0_26 = arith.constant 0 : index
    %c0_27 = arith.constant 0 : index
    %63 = vector.load %arg9[%c0_25, %c0_26, %c0_27] : memref<2x8x128xf32, #tpu.memory_space<vmem>>, vector<2x8x128xf32>
    tpu.vector_store %arg9[%c0_25, %c0_26, %c0_27], %62 {strides = array<i32>} : memref<2x8x128xf32, #tpu.memory_space<vmem>>, vector<2x8x128xf32>,
    return
  }
  func.func @transform_0(%arg0: i32) -> (i32, i32, i32) {
    %c0_i32 = arith.constant 0 : i32
    %c0_i32_0 = arith.constant 0 : i32
    %c0_i32_1 = arith.constant 0 : i32
    return %arg0, %c0_i32, %c0_i32_0 : i32, i32, i32
  }
  func.func @transform_1(%arg0: i32) -> (i32, i32, i32) {
    %c0_i32 = arith.constant 0 : i32
    %c0_i32_0 = arith.constant 0 : i32
    %c0_i32_1 = arith.constant 0 : i32
    return %arg0, %c0_i32, %c0_i32_0 : i32, i32, i32
  }
  func.func @transform_2(%arg0: i32) -> (i32, i32, i32) {
    %c0_i32 = arith.constant 0 : i32
    %c0_i32_0 = arith.constant 0 : i32
    %c0_i32_1 = arith.constant 0 : i32
    return %arg0, %c0_i32, %c0_i32_0 : i32, i32, i32
  }
  func.func @transform_3(%arg0: i32) -> (i32, i32) {
    %c0_i32 = arith.constant 0 : i32
    %c0_i32_0 = arith.constant 0 : i32
    %c0_i32_1 = arith.constant 0 : i32
    return %c0_i32, %c0_i32_0 : i32, i32
  }
  func.func @transform_4(%arg0: i32) -> (i32, i32) {
    %c0_i32 = arith.constant 0 : i32
    %c0_i32_0 = arith.constant 0 : i32
    %c0_i32_1 = arith.constant 0 : i32
    return %c0_i32, %c0_i32_0 : i32, i32
  }
  func.func @transform_5(%arg0: i32) -> (i32, i32) {
    %c0_i32 = arith.constant 0 : i32
    %c0_i32_0 = arith.constant 0 : i32
    %c0_i32_1 = arith.constant 0 : i32
    return %c0_i32, %c0_i32_0 : i32, i32
  }
  func.func @transform_6(%arg0: i32) -> (i32, i32) {
    %c0_i32 = arith.constant 0 : i32
    %c0_i32_0 = arith.constant 0 : i32
    %c0_i32_1 = arith.constant 0 : i32
    return %c0_i32, %c0_i32_0 : i32, i32
  }
  func.func @transform_7(%arg0: i32) -> (i32, i32) {
    %c0_i32 = arith.constant 0 : i32
    %c0_i32_0 = arith.constant 0 : i32
    %c0_i32_1 = arith.constant 0 : i32
    return %c0_i32, %c0_i32_0 : i32, i32
  }
  func.func @transform_8(%arg0: i32) -> (i32, i32, i32) {
    %c0_i32 = arith.constant 0 : i32
    %c0_i32_0 = arith.constant 0 : i32
    %c0_i32_1 = arith.constant 0 : i32
    return %arg0, %c0_i32, %c0_i32_0 : i32, i32, i32
  }
}

</mosaic_0001>

<llo_original>
// kernel: tpu_custom_call.1
$region0: #{tpu_custom_call.1}
  #allocation0 [shape = 'u32[]', space=smem, size = 0x4, offset = 0x4, fixed_abs, tag = 'smem constant byte address 0x4 - core index']
  #allocation1 [shape = 'u32[144,128]{1,0:T(1,128)}', space=vmem, size = 0x12000, scoped, tag = 'internal scratch']
  %s0 = inlined_call_operand.hbm [shape: f32[2,8,8], index: 0, kind: input, shape index: {}]
  %s1 = inlined_call_operand.hbm [shape: f32[2,8,8], index: 1, kind: input, shape index: {}]
  %s2 = inlined_call_operand.hbm [shape: f32[2,8,128], index: 2, kind: input, shape index: {}]
  %s3 = inlined_call_operand.hbm [shape: f32[128,1152], index: 3, kind: input, shape index: {}]
  %s4 = inlined_call_operand.vmem [shape: f32[1,384], index: 4, kind: input, shape index: {}]
  %s5 = inlined_call_operand.vmem [shape: f32[1,384], index: 5, kind: input, shape index: {}]
  %s6 = inlined_call_operand.vmem [shape: f32[1,384], index: 6, kind: input, shape index: {}]
  %s7 = inlined_call_operand.vmem [shape: f32[1,384], index: 7, kind: input, shape index: {}]
  %s8 = inlined_call_operand.hbm [shape: f32[2,8,128], index: 8, kind: output, shape index: {}]
  %s9 = sld [smem:[#allocation0]]
  $region58: #{tpu_custom_call.1} parent=0
    _
  %s11 = ssub.s32 1, %s9
  %s12 = scalar_select 0, %s11, %s9
  $region1: #{tpu_custom_call.1} parent=0
    #allocation2 [shape = 'u8[8192]{0}', space=vmem, size = 0x2000, scoped, tag = 'input window, operand 0, single buffered']
    #allocation3 [shape = 's32[1]{0}', space=sflag, size = 0x4, scoped, tag = 'scoped memory for tpu_custom_call.1']
    #allocation4 [shape = 's32[1]{0}', space=sflag, size = 0x4, scoped, tag = 'scoped memory for tpu_custom_call.1']
    #allocation5 [shape = 'u8[8192]{0}', space=vmem, size = 0x2000, scoped, tag = 'input window, operand 1, single buffered']
    #allocation6 [shape = 's32[1]{0}', space=sflag, size = 0x4, scoped, tag = 'scoped memory for tpu_custom_call.1']
    #allocation7 [shape = 'u8[8192]{0}', space=vmem, size = 0x2000, scoped, tag = 'input window, operand 2, single buffered']
    #allocation8 [shape = 'u8[589824]{0}', space=vmem, size = 0x90000, scoped, tag = 'input window, operand 3, single buffered']
    #allocation9 [shape = 's32[1]{0}', space=sflag, size = 0x4, scoped, tag = 'scoped memory for tpu_custom_call.1']
    #allocation10 [shape = 'u8[8192]{0}', space=vmem, size = 0x2000, scoped, tag = 'output window, operand 0, single buffered']
    %13 = vsyncpa [#allocation3], 0
    %14 = vsyncpa [#allocation6], 0
    %15 = vsyncpa [#allocation9], 0
    %16 = vsyncpa [#allocation4], 0
    // Predicated region
    $region2: #{tpu_custom_call.1} parent=1 // pred_check
      _
    $region3: #{tpu_custom_call.1} parent=1 // pred_check_branch
      %18 = sbr.rel (0) target = $region5
    $region4: #{tpu_custom_call.1} parent=1 // pred_region
      %s20 = ssub.s32 256, 256
      %21 = vsyncadd [#allocation3], %s20
      %s22 = sshll.u32 [#allocation2], 4
      %s23 = int_to_ptr.vmem [resolvable:$true] %s22
      %28 = dma.hbm_to_vmem [thread:$0]  %s0, 256, %s23, [#allocation3], 128, 128, 8
    $region5: #{tpu_custom_call.1} parent=1 // pred_fallthru
      _
    // Predicated region
    $region6: #{tpu_custom_call.1} parent=1 // pred_check
      _
    $region7: #{tpu_custom_call.1} parent=1 // pred_check_branch
      %30 = sbr.rel (0) target = $region9
    $region8: #{tpu_custom_call.1} parent=1 // pred_region
      %s32 = ssub.s32 256, 256
      %33 = vsyncadd [#allocation6], %s32
      %s34 = sshll.u32 [#allocation5], 4
      %s35 = int_to_ptr.vmem [resolvable:$true] %s34
      %40 = dma.hbm_to_vmem [thread:$0]  %s1, 256, %s35, [#allocation6], 128, 128, 8
    $region9: #{tpu_custom_call.1} parent=1 // pred_fallthru
      _
    // Predicated region
    $region10: #{tpu_custom_call.1} parent=1 // pred_check
      _
    $region11: #{tpu_custom_call.1} parent=1 // pred_check_branch
      %42 = sbr.rel (0) target = $region13
    $region12: #{tpu_custom_call.1} parent=1 // pred_region
      %s44 = ssub.s32 256, 256
      %45 = vsyncadd [#allocation6], %s44
      %s46 = sshll.u32 [#allocation7], 4
      %s47 = int_to_ptr.vmem [resolvable:$true] %s46
      %52 = dma.hbm_to_vmem [thread:$0]  %s2, 256, %s47, [#allocation6], 128, 128, 8
    $region13: #{tpu_custom_call.1} parent=1 // pred_fallthru
      _
    // Predicated region
    $region14: #{tpu_custom_call.1} parent=1 // pred_check
      _
    $region15: #{tpu_custom_call.1} parent=1 // pred_check_branch
      %54 = sbr.rel (0) target = $region17
    $region16: #{tpu_custom_call.1} parent=1 // pred_region
      %s56 = ssub.s32 18432, 18432
      %57 = vsyncadd [#allocation9], %s56
      %s58 = sshll.u32 [#allocation8], 4
      %s59 = int_to_ptr.vmem [resolvable:$true] %s58
      %64 = dma.hbm_to_vmem [thread:$0]  %s3, 18432, %s59, [#allocation9], 1152, 1152, 72
    $region17: #{tpu_custom_call.1} parent=1 // pred_fallthru
      _
    // Predicated region
    $region18: #{tpu_custom_call.1} parent=1 // pred_check
      _
    $region19: #{tpu_custom_call.1} parent=1 // pred_check_branch
      %66 = sbr.rel (0) target = $region21
    $region20: #{tpu_custom_call.1} parent=1 // pred_region
      _
    $region21: #{tpu_custom_call.1} parent=1 // pred_fallthru
      _
    // Predicated region
    $region22: #{tpu_custom_call.1} parent=1 // pred_check
      _
    $region23: #{tpu_custom_call.1} parent=1 // pred_check_branch
      %68 = sbr.rel (0) target = $region25
    $region24: #{tpu_custom_call.1} parent=1 // pred_region
      _
    $region25: #{tpu_custom_call.1} parent=1 // pred_fallthru
      _
    // Predicated region
    $region26: #{tpu_custom_call.1} parent=1 // pred_check
      _
    $region27: #{tpu_custom_call.1} parent=1 // pred_check_branch
      %70 = sbr.rel (0) target = $region29
    $region28: #{tpu_custom_call.1} parent=1 // pred_region
      _
    $region29: #{tpu_custom_call.1} parent=1 // pred_fallthru
      _
    // Predicated region
    $region30: #{tpu_custom_call.1} parent=1 // pred_check
      _
    $region31: #{tpu_custom_call.1} parent=1 // pred_check_branch
      %72 = sbr.rel (0) target = $region33
    $region32: #{tpu_custom_call.1} parent=1 // pred_region
      _
    $region33: #{tpu_custom_call.1} parent=1 // pred_fallthru
      _
    // Predicated region
    $region34: #{tpu_custom_call.1} parent=1 // pred_check
      _
    $region35: #{tpu_custom_call.1} parent=1 // pred_check_branch
      %74 = sbr.rel (0) target = $region37
    $region36: #{tpu_custom_call.1} parent=1 // pred_region
      %75 = dma.done [#allocation3], 256
    $region37: #{tpu_custom_call.1} parent=1 // pred_fallthru
      _
    // Predicated region
    $region38: #{tpu_custom_call.1} parent=1 // pred_check
      _
    $region39: #{tpu_custom_call.1} parent=1 // pred_check_branch
      %77 = sbr.rel (0) target = $region41
    $region40: #{tpu_custom_call.1} parent=1 // pred_region
      %78 = dma.done [#allocation6], 256
    $region41: #{tpu_custom_call.1} parent=1 // pred_fallthru
      _
    // Predicated region
    $region42: #{tpu_custom_call.1} parent=1 // pred_check
      _
    $region43: #{tpu_custom_call.1} parent=1 // pred_check_branch
      %80 = sbr.rel (0) target = $region45
    $region44: #{tpu_custom_call.1} parent=1 // pred_region
      %81 = dma.done [#allocation6], 256
    $region45: #{tpu_custom_call.1} parent=1 // pred_fallthru
      _
    // Predicated region
    $region46: #{tpu_custom_call.1} parent=1 // pred_check
      _
    $region47: #{tpu_custom_call.1} parent=1 // pred_check_branch
      %83 = sbr.rel (0) target = $region49
    $region48: #{tpu_custom_call.1} parent=1 // pred_region
      %84 = dma.done [#allocation9], 18432
    $region49: #{tpu_custom_call.1} parent=1 // pred_fallthru
      _
    %v85 = vld [vmem:[#allocation2] sm:$0xff]
    %v86 = vld [vmem:[#allocation2 + $0x8] sm:$0xff]
    %v87 = vld [vmem:[#allocation5] sm:$0xff]
    %v88 = vld [vmem:[#allocation5 + $0x8] sm:$0xff]
    %v89 = vld [vmem:[#allocation8] sm:$0xff]
    %v90 = vld [vmem:[#allocation8 + $0x8] sm:$0xff]
    %v91 = vld [vmem:[#allocation8 + $0x10] sm:$0xff]
    %v92 = vld [vmem:[#allocation8 + $0x18] sm:$0xff]
    %v93 = vld [vmem:[#allocation8 + $0x20] sm:$0xff]
    %v94 = vld [vmem:[#allocation8 + $0x28] sm:$0xff]
    %v95 = vld [vmem:[#allocation8 + $0x30] sm:$0xff]
    %v96 = vld [vmem:[#allocation8 + $0x38] sm:$0xff]
    %v97 = vld [vmem:[#allocation8 + $0x40] sm:$0xff]
    %v98 = vld [vmem:[#allocation8 + $0x48] sm:$0xff]
    %v99 = vld [vmem:[#allocation8 + $0x50] sm:$0xff]
    %v100 = vld [vmem:[#allocation8 + $0x58] sm:$0xff]
    %v101 = vld [vmem:[#allocation8 + $0x60] sm:$0xff]
    %v102 = vld [vmem:[#allocation8 + $0x68] sm:$0xff]
    %v103 = vld [vmem:[#allocation8 + $0x70] sm:$0xff]
    %v104 = vld [vmem:[#allocation8 + $0x78] sm:$0xff]
    %v105 = vld [vmem:[#allocation8 + $0x80] sm:$0xff]
    %v106 = vld [vmem:[#allocation8 + $0x88] sm:$0xff]
    %v107 = vld [vmem:[#allocation8 + $0x90] sm:$0xff]
    %v108 = vld [vmem:[#allocation8 + $0x98] sm:$0xff]
    %v109 = vld [vmem:[#allocation8 + $0xa0] sm:$0xff]
    %v110 = vld [vmem:[#allocation8 + $0xa8] sm:$0xff]
    %v111 = vld [vmem:[#allocation8 + $0xb0] sm:$0xff]
    %v112 = vld [vmem:[#allocation8 + $0xb8] sm:$0xff]
    %v113 = vld [vmem:[#allocation8 + $0xc0] sm:$0xff]
    %v114 = vld [vmem:[#allocation8 + $0xc8] sm:$0xff]
    %v115 = vld [vmem:[#allocation8 + $0xd0] sm:$0xff]
    %v116 = vld [vmem:[#allocation8 + $0xd8] sm:$0xff]
    %v117 = vld [vmem:[#allocation8 + $0xe0] sm:$0xff]
    %v118 = vld [vmem:[#allocation8 + $0xe8] sm:$0xff]
    %v119 = vld [vmem:[#allocation8 + $0xf0] sm:$0xff]
    %v120 = vld [vmem:[#allocation8 + $0xf8] sm:$0xff]
    %v121 = vld [vmem:[#allocation8 + $0x100] sm:$0xff]
    %v122 = vld [vmem:[#allocation8 + $0x108] sm:$0xff]
    %v123 = vld [vmem:[#allocation8 + $0x110] sm:$0xff]
    %v124 = vld [vmem:[#allocation8 + $0x118] sm:$0xff]
    %v125 = vld [vmem:[#allocation8 + $0x120] sm:$0xff]
    %v126 = vld [vmem:[#allocation8 + $0x128] sm:$0xff]
    %v127 = vld [vmem:[#allocation8 + $0x130] sm:$0xff]
    %v128 = vld [vmem:[#allocation8 + $0x138] sm:$0xff]
    %v129 = vld [vmem:[#allocation8 + $0x140] sm:$0xff]
    %v130 = vld [vmem:[#allocation8 + $0x148] sm:$0xff]
    %v131 = vld [vmem:[#allocation8 + $0x150] sm:$0xff]
    %v132 = vld [vmem:[#allocation8 + $0x158] sm:$0xff]
    %v133 = vld [vmem:[#allocation8 + $0x160] sm:$0xff]
    %v134 = vld [vmem:[#allocation8 + $0x168] sm:$0xff]
    %v135 = vld [vmem:[#allocation8 + $0x170] sm:$0xff]
    %v136 = vld [vmem:[#allocation8 + $0x178] sm:$0xff]
    %v137 = vld [vmem:[#allocation8 + $0x180] sm:$0xff]
    %v138 = vld [vmem:[#allocation8 + $0x188] sm:$0xff]
    %v139 = vld [vmem:[#allocation8 + $0x190] sm:$0xff]
    %v140 = vld [vmem:[#allocation8 + $0x198] sm:$0xff]
    %v141 = vld [vmem:[#allocation8 + $0x1a0] sm:$0xff]
    %v142 = vld [vmem:[#allocation8 + $0x1a8] sm:$0xff]
    %v143 = vld [vmem:[#allocation8 + $0x1b0] sm:$0xff]
    %v144 = vld [vmem:[#allocation8 + $0x1b8] sm:$0xff]
    %v145 = vld [vmem:[#allocation8 + $0x1c0] sm:$0xff]
    %v146 = vld [vmem:[#allocation8 + $0x1c8] sm:$0xff]
    %v147 = vld [vmem:[#allocation8 + $0x1d0] sm:$0xff]
    %v148 = vld [vmem:[#allocation8 + $0x1d8] sm:$0xff]
    %v149 = vld [vmem:[#allocation8 + $0x1e0] sm:$0xff]
    %v150 = vld [vmem:[#allocation8 + $0x1e8] sm:$0xff]
    %v151 = vld [vmem:[#allocation8 + $0x1f0] sm:$0xff]
    %v152 = vld [vmem:[#allocation8 + $0x1f8] sm:$0xff]
    %v153 = vld [vmem:[#allocation8 + $0x200] sm:$0xff]
    %v154 = vld [vmem:[#allocation8 + $0x208] sm:$0xff]
    %v155 = vld [vmem:[#allocation8 + $0x210] sm:$0xff]
    %v156 = vld [vmem:[#allocation8 + $0x218] sm:$0xff]
    %v157 = vld [vmem:[#allocation8 + $0x220] sm:$0xff]
    %v158 = vld [vmem:[#allocation8 + $0x228] sm:$0xff]
    %v159 = vld [vmem:[#allocation8 + $0x230] sm:$0xff]
    %v160 = vld [vmem:[#allocation8 + $0x238] sm:$0xff]
    %v161 = vld [vmem:[#allocation8 + $0x240] sm:$0xff]
    %v162 = vld [vmem:[#allocation8 + $0x248] sm:$0xff]
    %v163 = vld [vmem:[#allocation8 + $0x250] sm:$0xff]
    %v164 = vld [vmem:[#allocation8 + $0x258] sm:$0xff]
    %v165 = vld [vmem:[#allocation8 + $0x260] sm:$0xff]
    %v166 = vld [vmem:[#allocation8 + $0x268] sm:$0xff]
    %v167 = vld [vmem:[#allocation8 + $0x270] sm:$0xff]
    %v168 = vld [vmem:[#allocation8 + $0x278] sm:$0xff]
    %v169 = vld [vmem:[#allocation8 + $0x280] sm:$0xff]
    %v170 = vld [vmem:[#allocation8 + $0x288] sm:$0xff]
    %v171 = vld [vmem:[#allocation8 + $0x290] sm:$0xff]
    %v172 = vld [vmem:[#allocation8 + $0x298] sm:$0xff]
    %v173 = vld [vmem:[#allocation8 + $0x2a0] sm:$0xff]
    %v174 = vld [vmem:[#allocation8 + $0x2a8] sm:$0xff]
    %v175 = vld [vmem:[#allocation8 + $0x2b0] sm:$0xff]
    %v176 = vld [vmem:[#allocation8 + $0x2b8] sm:$0xff]
    %v177 = vld [vmem:[#allocation8 + $0x2c0] sm:$0xff]
    %v178 = vld [vmem:[#allocation8 + $0x2c8] sm:$0xff]
    %v179 = vld [vmem:[#allocation8 + $0x2d0] sm:$0xff]
    %v180 = vld [vmem:[#allocation8 + $0x2d8] sm:$0xff]
    %v181 = vld [vmem:[#allocation8 + $0x2e0] sm:$0xff]
    %v182 = vld [vmem:[#allocation8 + $0x2e8] sm:$0xff]
    %v183 = vld [vmem:[#allocation8 + $0x2f0] sm:$0xff]
    %v184 = vld [vmem:[#allocation8 + $0x2f8] sm:$0xff]
    %v185 = vld [vmem:[#allocation8 + $0x300] sm:$0xff]
    %v186 = vld [vmem:[#allocation8 + $0x308] sm:$0xff]
    %v187 = vld [vmem:[#allocation8 + $0x310] sm:$0xff]
    %v188 = vld [vmem:[#allocation8 + $0x318] sm:$0xff]
    %v189 = vld [vmem:[#allocation8 + $0x320] sm:$0xff]
    %v190 = vld [vmem:[#allocation8 + $0x328] sm:$0xff]
    %v191 = vld [vmem:[#allocation8 + $0x330] sm:$0xff]
    %v192 = vld [vmem:[#allocation8 + $0x338] sm:$0xff]
    %v193 = vld [vmem:[#allocation8 + $0x340] sm:$0xff]
    %v194 = vld [vmem:[#allocation8 + $0x348] sm:$0xff]
    %v195 = vld [vmem:[#allocation8 + $0x350] sm:$0xff]
    %v196 = vld [vmem:[#allocation8 + $0x358] sm:$0xff]
    %v197 = vld [vmem:[#allocation8 + $0x360] sm:$0xff]
    %v198 = vld [vmem:[#allocation8 + $0x368] sm:$0xff]
    %v199 = vld [vmem:[#allocation8 + $0x370] sm:$0xff]
    %v200 = vld [vmem:[#allocation8 + $0x378] sm:$0xff]
    %v201 = vld [vmem:[#allocation8 + $0x380] sm:$0xff]
    %v202 = vld [vmem:[#allocation8 + $0x388] sm:$0xff]
    %v203 = vld [vmem:[#allocation8 + $0x390] sm:$0xff]
    %v204 = vld [vmem:[#allocation8 + $0x398] sm:$0xff]
    %v205 = vld [vmem:[#allocation8 + $0x3a0] sm:$0xff]
    %v206 = vld [vmem:[#allocation8 + $0x3a8] sm:$0xff]
    %v207 = vld [vmem:[#allocation8 + $0x3b0] sm:$0xff]
    %v208 = vld [vmem:[#allocation8 + $0x3b8] sm:$0xff]
    %v209 = vld [vmem:[#allocation8 + $0x3c0] sm:$0xff]
    %v210 = vld [vmem:[#allocation8 + $0x3c8] sm:$0xff]
    %v211 = vld [vmem:[#allocation8 + $0x3d0] sm:$0xff]
    %v212 = vld [vmem:[#allocation8 + $0x3d8] sm:$0xff]
    %v213 = vld [vmem:[#allocation8 + $0x3e0] sm:$0xff]
    %v214 = vld [vmem:[#allocation8 + $0x3e8] sm:$0xff]
    %v215 = vld [vmem:[#allocation8 + $0x3f0] sm:$0xff]
    %v216 = vld [vmem:[#allocation8 + $0x3f8] sm:$0xff]
    %v217 = vld [vmem:[#allocation8 + $0x400] sm:$0xff]
    %v218 = vld [vmem:[#allocation8 + $0x408] sm:$0xff]
    %v219 = vld [vmem:[#allocation8 + $0x410] sm:$0xff]
    %v220 = vld [vmem:[#allocation8 + $0x418] sm:$0xff]
    %v221 = vld [vmem:[#allocation8 + $0x420] sm:$0xff]
    %v222 = vld [vmem:[#allocation8 + $0x428] sm:$0xff]
    %v223 = vld [vmem:[#allocation8 + $0x430] sm:$0xff]
    %v224 = vld [vmem:[#allocation8 + $0x438] sm:$0xff]
    %v225 = vld [vmem:[#allocation8 + $0x440] sm:$0xff]
    %v226 = vld [vmem:[#allocation8 + $0x448] sm:$0xff]
    %v227 = vld [vmem:[#allocation8 + $0x450] sm:$0xff]
    %v228 = vld [vmem:[#allocation8 + $0x458] sm:$0xff]
    %v229 = vld [vmem:[#allocation8 + $0x460] sm:$0xff]
    %v230 = vld [vmem:[#allocation8 + $0x468] sm:$0xff]
    %v231 = vld [vmem:[#allocation8 + $0x470] sm:$0xff]
    %v232 = vld [vmem:[#allocation8 + $0x478] sm:$0xff]
    %v233 = vld [vmem:[%s4] sm:$0x7]
    %v234 = vld [vmem:[%s5] sm:$0x7]
    %v235 = vld [vmem:[%s6] sm:$0x7]
    %v236 = vld [vmem:[%s7] sm:$0x7]
    %vm237 = vcmask 64512
    %v238 = vsel %vm237, %v85, 0.0
    %239 = vadd.xlane.f32.xlu0 %v238
    %v240 = vpop.xlane.xlu0 %239
    %v241 = vsel %vm237, %v86, 0.0
    %242 = vadd.xlane.f32.xlu0 %v241
    %v243 = vpop.xlane.xlu0 %242
    %v244 = vsel %vm237, %v87, 0.0
    %245 = vadd.xlane.f32.xlu0 %v244
    %v246 = vpop.xlane.xlu0 %245
    %v247 = vsel %vm237, %v88, 0.0
    %248 = vadd.xlane.f32.xlu0 %v247
    %v249 = vpop.xlane.xlu0 %248
    %v251 = vlaneseq
    %v252 = vshrl.u32 %v251, 7
    %v253 = vsub.s32 0, %v252
    %v254 = vrot.slane %v234, %v253
    %v255 = vlaneseq
    %v256 = vshrl.u32 %v255, 7
    %v257 = vsub.s32 1, %v256
    %v258 = vrot.slane %v234, %v257
    %v259 = vlaneseq
    %v260 = vshrl.u32 %v259, 7
    %v261 = vsub.s32 2, %v260
    %v262 = vrot.slane %v234, %v261
    %v266 = vmul.f32 %v240, %v254
    %v267 = vmul.f32 %v240, %v258
    %v268 = vmul.f32 %v240, %v262
    %v269 = vmul.f32 %v243, %v254
    %v270 = vmul.f32 %v243, %v258
    %v271 = vmul.f32 %v243, %v262
    %v273 = vlaneseq
    %v274 = vshrl.u32 %v273, 7
    %v275 = vsub.s32 0, %v274
    %v276 = vrot.slane %v235, %v275
    %v277 = vlaneseq
    %v278 = vshrl.u32 %v277, 7
    %v279 = vsub.s32 1, %v278
    %v280 = vrot.slane %v235, %v279
    %v281 = vlaneseq
    %v282 = vshrl.u32 %v281, 7
    %v283 = vsub.s32 2, %v282
    %v284 = vrot.slane %v235, %v283
    %v288 = vmul.f32 %v246, %v276
    %v289 = vmul.f32 %v246, %v280
    %v290 = vmul.f32 %v246, %v284
    %v291 = vmul.f32 %v249, %v276
    %v292 = vmul.f32 %v249, %v280
    %v293 = vmul.f32 %v249, %v284
    %v294 = vadd.f32 %v266, %v288
    %v295 = vadd.f32 %v267, %v289
    %v296 = vadd.f32 %v268, %v290
    %v297 = vadd.f32 %v269, %v291
    %v298 = vadd.f32 %v270, %v292
    %v299 = vadd.f32 %v271, %v293
    %v301 = vlaneseq
    %v302 = vshrl.u32 %v301, 7
    %v303 = vsub.s32 0, %v302
    %v304 = vrot.slane %v236, %v303
    %v305 = vlaneseq
    %v306 = vshrl.u32 %v305, 7
    %v307 = vsub.s32 1, %v306
    %v308 = vrot.slane %v236, %v307
    %v309 = vlaneseq
    %v310 = vshrl.u32 %v309, 7
    %v311 = vsub.s32 2, %v310
    %v312 = vrot.slane %v236, %v311
    %v316 = vadd.f32 %v294, %v304
    %v317 = vadd.f32 %v295, %v308
    %v318 = vadd.f32 %v296, %v312
    %v319 = vadd.f32 %v297, %v304
    %v320 = vadd.f32 %v298, %v308
    %v321 = vadd.f32 %v299, %v312
    %v323 = vlaneseq
    %v324 = vshrl.u32 %v323, 7
    %v325 = vsub.s32 0, %v324
    %v326 = vrot.slane %v233, %v325
    %v327 = vlaneseq
    %v328 = vshrl.u32 %v327, 7
    %v329 = vsub.s32 1, %v328
    %v330 = vrot.slane %v233, %v329
    %v331 = vlaneseq
    %v332 = vshrl.u32 %v331, 7
    %v333 = vsub.s32 2, %v332
    %v334 = vrot.slane %v233, %v333
    %v338 = vld [vmem:[#allocation7] sm:$0xff]
    %v339 = vld [vmem:[#allocation7 + $0x8] sm:$0xff]
    %340 = vmatprep.subr.mxu0 %v90
    %341 = vmatpush1.msra.mxu0 %v89
    %342 = vmatprep.subr.mxu0 %v99
    %343 = vmatpush1.msra.mxu0 %v98
    %344 = vmatprep.subr.mxu0 %v108
    %345 = vmatpush1.msra.mxu0 %v107
    %346 = vmatprep.subr.mxu0 %v117
    %347 = vmatpush1.msra.mxu0 %v116
    %348 = vmatprep.subr.mxu0 %v126
    %349 = vmatpush1.msra.mxu0 %v125
    %350 = vmatprep.subr.mxu0 %v135
    %351 = vmatpush1.msra.mxu0 %v134
    %352 = vmatprep.subr.mxu0 %v144
    %353 = vmatpush1.msra.mxu0 %v143
    %354 = vmatprep.subr.mxu0 %v153
    %355 = vmatpush1.msra.mxu0 %v152
    %356 = vmatprep.subr.mxu0 %v162
    %357 = vmatpush1.msra.mxu0 %v161
    %358 = vmatprep.subr.mxu0 %v171
    %359 = vmatpush1.msra.mxu0 %v170
    %360 = vmatprep.subr.mxu0 %v180
    %361 = vmatpush1.msra.mxu0 %v179
    %362 = vmatprep.subr.mxu0 %v189
    %363 = vmatpush1.msra.mxu0 %v188
    %364 = vmatprep.subr.mxu0 %v198
    %365 = vmatpush1.msra.mxu0 %v197
    %366 = vmatprep.subr.mxu0 %v207
    %367 = vmatpush1.msra.mxu0 %v206
    %368 = vmatprep.subr.mxu0 %v216
    %369 = vmatpush1.msra.mxu0 %v215
    %370 = vmatprep.subr.mxu0 %v225
    %371 = vmatpush1.msra.mxu0 %v224
    %372 = vmatprep.subr.mxu0 0.0
    %373 = vmatpush1.msra.mxu0 0.0
    %374 = vmatprep.subr.mxu0 0.0
    %375 = vmatpush1.msra.mxu0 0.0
    %376 = vmatprep.subr.mxu0 0.0
    %377 = vmatpush1.msra.mxu0 0.0
    %378 = vmatprep.subr.mxu0 0.0
    %379 = vmatpush1.msra.mxu0 0.0
    %380 = vmatprep.subr.mxu0 0.0
    %381 = vmatpush1.msra.mxu0 0.0
    %382 = vmatprep.subr.mxu0 0.0
    %383 = vmatpush1.msra.mxu0 0.0
    %384 = vmatprep.subr.mxu0 0.0
    %385 = vmatpush1.msra.mxu0 0.0
    %386 = vmatprep.subr.mxu0 0.0
    %387 = vmatpush1.msra.mxu0 0.0
    %388 = vmatprep.subr.mxu0 0.0
    %389 = vmatpush1.msra.mxu0 0.0
    %390 = vmatprep.subr.mxu0 0.0
    %391 = vmatpush1.msra.mxu0 0.0
    %392 = vmatprep.subr.mxu0 0.0
    %393 = vmatpush1.msra.mxu0 0.0
    %394 = vmatprep.subr.mxu0 0.0
    %395 = vmatpush1.msra.mxu0 0.0
    %396 = vmatprep.subr.mxu0 0.0
    %397 = vmatpush1.msra.mxu0 0.0
    %398 = vmatprep.subr.mxu0 0.0
    %399 = vmatpush1.msra.mxu0 0.0
    %400 = vmatprep.subr.mxu0 0.0
    %401 = vmatpush1.msra.mxu0 0.0
    %402 = vmatprep.subr.mxu0 0.0
    %403 = vmatpush1.msra.mxu0 0.0
    %404 = vmatprep.mubr.f32.mxu0 0.0
    %405 = vmatmul.mubr.f32.gmra.mrb[0].mxu0 %v338
    %v406 = vpop.f32.mrb[0].mxu0
    %v407 = vadd.f32 0.0, %v406
    %v408 = vpop.f32.mrb[0].mxu0
    %v409 = vadd.f32 0.0, %v408
    %410 = vmatprep.mubr.f32.mxu0 0.0
    %411 = vmatmul.mubr.f32.gmra.mrb[0].mxu0 %v339
    %v412 = vpop.f32.mrb[0].mxu0
    %v413 = vadd.f32 0.0, %v412
    %v414 = vpop.f32.mrb[0].mxu0
    %v415 = vadd.f32 0.0, %v414
    %416 = vdwg.mxu0
    %417 = vmatprep.subr.mxu0 %v92
    %418 = vmatpush1.msra.mxu0 %v91
    %419 = vmatprep.subr.mxu0 %v101
    %420 = vmatpush1.msra.mxu0 %v100
    %421 = vmatprep.subr.mxu0 %v110
    %422 = vmatpush1.msra.mxu0 %v109
    %423 = vmatprep.subr.mxu0 %v119
    %424 = vmatpush1.msra.mxu0 %v118
    %425 = vmatprep.subr.mxu0 %v128
    %426 = vmatpush1.msra.mxu0 %v127
    %427 = vmatprep.subr.mxu0 %v137
    %428 = vmatpush1.msra.mxu0 %v136
    %429 = vmatprep.subr.mxu0 %v146
    %430 = vmatpush1.msra.mxu0 %v145
    %431 = vmatprep.subr.mxu0 %v155
    %432 = vmatpush1.msra.mxu0 %v154
    %433 = vmatprep.subr.mxu0 %v164
    %434 = vmatpush1.msra.mxu0 %v163
    %435 = vmatprep.subr.mxu0 %v173
    %436 = vmatpush1.msra.mxu0 %v172
    %437 = vmatprep.subr.mxu0 %v182
    %438 = vmatpush1.msra.mxu0 %v181
    %439 = vmatprep.subr.mxu0 %v191
    %440 = vmatpush1.msra.mxu0 %v190
    %441 = vmatprep.subr.mxu0 %v200
    %442 = vmatpush1.msra.mxu0 %v199
    %443 = vmatprep.subr.mxu0 %v209
    %444 = vmatpush1.msra.mxu0 %v208
    %445 = vmatprep.subr.mxu0 %v218
    %446 = vmatpush1.msra.mxu0 %v217
    %447 = vmatprep.subr.mxu0 %v227
    %448 = vmatpush1.msra.mxu0 %v226
    %449 = vmatprep.subr.mxu0 0.0
    %450 = vmatpush1.msra.mxu0 0.0
    %451 = vmatprep.subr.mxu0 0.0
    %452 = vmatpush1.msra.mxu0 0.0
    %453 = vmatprep.subr.mxu0 0.0
    %454 = vmatpush1.msra.mxu0 0.0
    %455 = vmatprep.subr.mxu0 0.0
    %456 = vmatpush1.msra.mxu0 0.0
    %457 = vmatprep.subr.mxu0 0.0
    %458 = vmatpush1.msra.mxu0 0.0
    %459 = vmatprep.subr.mxu0 0.0
    %460 = vmatpush1.msra.mxu0 0.0
    %461 = vmatprep.subr.mxu0 0.0
    %462 = vmatpush1.msra.mxu0 0.0
    %463 = vmatprep.subr.mxu0 0.0
    %464 = vmatpush1.msra.mxu0 0.0
    %465 = vmatprep.subr.mxu0 0.0
    %466 = vmatpush1.msra.mxu0 0.0
    %467 = vmatprep.subr.mxu0 0.0
    %468 = vmatpush1.msra.mxu0 0.0
    %469 = vmatprep.subr.mxu0 0.0
    %470 = vmatpush1.msra.mxu0 0.0
    %471 = vmatprep.subr.mxu0 0.0
    %472 = vmatpush1.msra.mxu0 0.0
    %473 = vmatprep.subr.mxu0 0.0
    %474 = vmatpush1.msra.mxu0 0.0
    %475 = vmatprep.subr.mxu0 0.0
    %476 = vmatpush1.msra.mxu0 0.0
    %477 = vmatprep.subr.mxu0 0.0
    %478 = vmatpush1.msra.mxu0 0.0
    %479 = vmatprep.subr.mxu0 0.0
    %480 = vmatpush1.msra.mxu0 0.0
    %481 = vmatprep.mubr.f32.mxu0 0.0
    %482 = vmatmul.mubr.f32.gmra.mrb[0].mxu0 %v338
    %v483 = vpop.f32.mrb[0].mxu0
    %v484 = vadd.f32 0.0, %v483
    %v485 = vpop.f32.mrb[0].mxu0
    %v486 = vadd.f32 0.0, %v485
    %487 = vmatprep.mubr.f32.mxu0 0.0
    %488 = vmatmul.mubr.f32.gmra.mrb[0].mxu0 %v339
    %v489 = vpop.f32.mrb[0].mxu0
    %v490 = vadd.f32 0.0, %v489
    %v491 = vpop.f32.mrb[0].mxu0
    %v492 = vadd.f32 0.0, %v491
    %493 = vdwg.mxu0
    %494 = vmatprep.subr.mxu0 %v94
    %495 = vmatpush1.msra.mxu0 %v93
    %496 = vmatprep.subr.mxu0 %v103
    %497 = vmatpush1.msra.mxu0 %v102
    %498 = vmatprep.subr.mxu0 %v112
    %499 = vmatpush1.msra.mxu0 %v111
    %500 = vmatprep.subr.mxu0 %v121
    %501 = vmatpush1.msra.mxu0 %v120
    %502 = vmatprep.subr.mxu0 %v130
    %503 = vmatpush1.msra.mxu0 %v129
    %504 = vmatprep.subr.mxu0 %v139
    %505 = vmatpush1.msra.mxu0 %v138
    %506 = vmatprep.subr.mxu0 %v148
    %507 = vmatpush1.msra.mxu0 %v147
    %508 = vmatprep.subr.mxu0 %v157
    %509 = vmatpush1.msra.mxu0 %v156
    %510 = vmatprep.subr.mxu0 %v166
    %511 = vmatpush1.msra.mxu0 %v165
    %512 = vmatprep.subr.mxu0 %v175
    %513 = vmatpush1.msra.mxu0 %v174
    %514 = vmatprep.subr.mxu0 %v184
    %515 = vmatpush1.msra.mxu0 %v183
    %516 = vmatprep.subr.mxu0 %v193
    %517 = vmatpush1.msra.mxu0 %v192
    %518 = vmatprep.subr.mxu0 %v202
    %519 = vmatpush1.msra.mxu0 %v201
    %520 = vmatprep.subr.mxu0 %v211
    %521 = vmatpush1.msra.mxu0 %v210
    %522 = vmatprep.subr.mxu0 %v220
    %523 = vmatpush1.msra.mxu0 %v219
    %524 = vmatprep.subr.mxu0 %v229
    %525 = vmatpush1.msra.mxu0 %v228
    %526 = vmatprep.subr.mxu0 0.0
    %527 = vmatpush1.msra.mxu0 0.0
    %528 = vmatprep.subr.mxu0 0.0
    %529 = vmatpush1.msra.mxu0 0.0
    %530 = vmatprep.subr.mxu0 0.0
    %531 = vmatpush1.msra.mxu0 0.0
    %532 = vmatprep.subr.mxu0 0.0
    %533 = vmatpush1.msra.mxu0 0.0
    %534 = vmatprep.subr.mxu0 0.0
    %535 = vmatpush1.msra.mxu0 0.0
    %536 = vmatprep.subr.mxu0 0.0
    %537 = vmatpush1.msra.mxu0 0.0
    %538 = vmatprep.subr.mxu0 0.0
    %539 = vmatpush1.msra.mxu0 0.0
    %540 = vmatprep.subr.mxu0 0.0
    %541 = vmatpush1.msra.mxu0 0.0
    %542 = vmatprep.subr.mxu0 0.0
    %543 = vmatpush1.msra.mxu0 0.0
    %544 = vmatprep.subr.mxu0 0.0
    %545 = vmatpush1.msra.mxu0 0.0
    %546 = vmatprep.subr.mxu0 0.0
    %547 = vmatpush1.msra.mxu0 0.0
    %548 = vmatprep.subr.mxu0 0.0
    %549 = vmatpush1.msra.mxu0 0.0
    %550 = vmatprep.subr.mxu0 0.0
    %551 = vmatpush1.msra.mxu0 0.0
    %552 = vmatprep.subr.mxu0 0.0
    %553 = vmatpush1.msra.mxu0 0.0
    %554 = vmatprep.subr.mxu0 0.0
    %555 = vmatpush1.msra.mxu0 0.0
    %556 = vmatprep.subr.mxu0 0.0
    %557 = vmatpush1.msra.mxu0 0.0
    %558 = vmatprep.mubr.f32.mxu0 0.0
    %559 = vmatmul.mubr.f32.gmra.mrb[0].mxu0 %v338
    %v560 = vpop.f32.mrb[0].mxu0
    %v561 = vadd.f32 0.0, %v560
    %v562 = vpop.f32.mrb[0].mxu0
    %v563 = vadd.f32 0.0, %v562
    %564 = vmatprep.mubr.f32.mxu0 0.0
    %565 = vmatmul.mubr.f32.gmra.mrb[0].mxu0 %v339
    %v566 = vpop.f32.mrb[0].mxu0
    %v567 = vadd.f32 0.0, %v566
    %v568 = vpop.f32.mrb[0].mxu0
    %v569 = vadd.f32 0.0, %v568
    %570 = vdwg.mxu0
    %571 = vmatprep.subr.mxu0 %v96
    %572 = vmatpush1.msra.mxu0 %v95
    %573 = vmatprep.subr.mxu0 %v105
    %574 = vmatpush1.msra.mxu0 %v104
    %575 = vmatprep.subr.mxu0 %v114
    %576 = vmatpush1.msra.mxu0 %v113
    %577 = vmatprep.subr.mxu0 %v123
    %578 = vmatpush1.msra.mxu0 %v122
    %579 = vmatprep.subr.mxu0 %v132
    %580 = vmatpush1.msra.mxu0 %v131
    %581 = vmatprep.subr.mxu0 %v141
    %582 = vmatpush1.msra.mxu0 %v140
    %583 = vmatprep.subr.mxu0 %v150
    %584 = vmatpush1.msra.mxu0 %v149
    %585 = vmatprep.subr.mxu0 %v159
    %586 = vmatpush1.msra.mxu0 %v158
    %587 = vmatprep.subr.mxu0 %v168
    %588 = vmatpush1.msra.mxu0 %v167
    %589 = vmatprep.subr.mxu0 %v177
    %590 = vmatpush1.msra.mxu0 %v176
    %591 = vmatprep.subr.mxu0 %v186
    %592 = vmatpush1.msra.mxu0 %v185
    %593 = vmatprep.subr.mxu0 %v195
    %594 = vmatpush1.msra.mxu0 %v194
    %595 = vmatprep.subr.mxu0 %v204
    %596 = vmatpush1.msra.mxu0 %v203
    %597 = vmatprep.subr.mxu0 %v213
    %598 = vmatpush1.msra.mxu0 %v212
    %599 = vmatprep.subr.mxu0 %v222
    %600 = vmatpush1.msra.mxu0 %v221
    %601 = vmatprep.subr.mxu0 %v231
    %602 = vmatpush1.msra.mxu0 %v230
    %603 = vmatprep.subr.mxu0 0.0
    %604 = vmatpush1.msra.mxu0 0.0
    %605 = vmatprep.subr.mxu0 0.0
    %606 = vmatpush1.msra.mxu0 0.0
    %607 = vmatprep.subr.mxu0 0.0
    %608 = vmatpush1.msra.mxu0 0.0
    %609 = vmatprep.subr.mxu0 0.0
    %610 = vmatpush1.msra.mxu0 0.0
    %611 = vmatprep.subr.mxu0 0.0
    %612 = vmatpush1.msra.mxu0 0.0
    %613 = vmatprep.subr.mxu0 0.0
    %614 = vmatpush1.msra.mxu0 0.0
    %615 = vmatprep.subr.mxu0 0.0
    %616 = vmatpush1.msra.mxu0 0.0
    %617 = vmatprep.subr.mxu0 0.0
    %618 = vmatpush1.msra.mxu0 0.0
    %619 = vmatprep.subr.mxu0 0.0
    %620 = vmatpush1.msra.mxu0 0.0
    %621 = vmatprep.subr.mxu0 0.0
    %622 = vmatpush1.msra.mxu0 0.0
    %623 = vmatprep.subr.mxu0 0.0
    %624 = vmatpush1.msra.mxu0 0.0
    %625 = vmatprep.subr.mxu0 0.0
    %626 = vmatpush1.msra.mxu0 0.0
    %627 = vmatprep.subr.mxu0 0.0
    %628 = vmatpush1.msra.mxu0 0.0
    %629 = vmatprep.subr.mxu0 0.0
    %630 = vmatpush1.msra.mxu0 0.0
    %631 = vmatprep.subr.mxu0 0.0
    %632 = vmatpush1.msra.mxu0 0.0
    %633 = vmatprep.subr.mxu0 0.0
    %634 = vmatpush1.msra.mxu0 0.0
    %635 = vmatprep.mubr.f32.mxu0 0.0
    %636 = vmatmul.mubr.f32.gmra.mrb[0].mxu0 %v338
    %v637 = vpop.f32.mrb[0].mxu0
    %v638 = vadd.f32 0.0, %v637
    %v639 = vpop.f32.mrb[0].mxu0
    %v640 = vadd.f32 0.0, %v639
    %641 = vmatprep.mubr.f32.mxu0 0.0
    %642 = vmatmul.mubr.f32.gmra.mrb[0].mxu0 %v339
    %v643 = vpop.f32.mrb[0].mxu0
    %v644 = vadd.f32 0.0, %v643
    %v645 = vpop.f32.mrb[0].mxu0
    %v646 = vadd.f32 0.0, %v645
    %647 = vdwg.mxu0
    %648 = vmatprep.subr.mxu0 0.0
    %649 = vmatpush1.msra.mxu0 %v97
    %650 = vmatprep.subr.mxu0 0.0
    %651 = vmatpush1.msra.mxu0 %v106
    %652 = vmatprep.subr.mxu0 0.0
    %653 = vmatpush1.msra.mxu0 %v115
    %654 = vmatprep.subr.mxu0 0.0
    %655 = vmatpush1.msra.mxu0 %v124
    %656 = vmatprep.subr.mxu0 0.0
    %657 = vmatpush1.msra.mxu0 %v133
    %658 = vmatprep.subr.mxu0 0.0
    %659 = vmatpush1.msra.mxu0 %v142
    %660 = vmatprep.subr.mxu0 0.0
    %661 = vmatpush1.msra.mxu0 %v151
    %662 = vmatprep.subr.mxu0 0.0
    %663 = vmatpush1.msra.mxu0 %v160
    %664 = vmatprep.subr.mxu0 0.0
    %665 = vmatpush1.msra.mxu0 %v169
    %666 = vmatprep.subr.mxu0 0.0
    %667 = vmatpush1.msra.mxu0 %v178
    %668 = vmatprep.subr.mxu0 0.0
    %669 = vmatpush1.msra.mxu0 %v187
    %670 = vmatprep.subr.mxu0 0.0
    %671 = vmatpush1.msra.mxu0 %v196
    %672 = vmatprep.subr.mxu0 0.0
    %673 = vmatpush1.msra.mxu0 %v205
    %674 = vmatprep.subr.mxu0 0.0
    %675 = vmatpush1.msra.mxu0 %v214
    %676 = vmatprep.subr.mxu0 0.0
    %677 = vmatpush1.msra.mxu0 %v223
    %678 = vmatprep.subr.mxu0 0.0
    %679 = vmatpush1.msra.mxu0 %v232
    %680 = vmatprep.subr.mxu0 0.0
    %681 = vmatpush1.msra.mxu0 0.0
    %682 = vmatprep.subr.mxu0 0.0
    %683 = vmatpush1.msra.mxu0 0.0
    %684 = vmatprep.subr.mxu0 0.0
    %685 = vmatpush1.msra.mxu0 0.0
    %686 = vmatprep.subr.mxu0 0.0
    %687 = vmatpush1.msra.mxu0 0.0
    %688 = vmatprep.subr.mxu0 0.0
    %689 = vmatpush1.msra.mxu0 0.0
    %690 = vmatprep.subr.mxu0 0.0
    %691 = vmatpush1.msra.mxu0 0.0
    %692 = vmatprep.subr.mxu0 0.0
    %693 = vmatpush1.msra.mxu0 0.0
    %694 = vmatprep.subr.mxu0 0.0
    %695 = vmatpush1.msra.mxu0 0.0
    %696 = vmatprep.subr.mxu0 0.0
    %697 = vmatpush1.msra.mxu0 0.0
    %698 = vmatprep.subr.mxu0 0.0
    %699 = vmatpush1.msra.mxu0 0.0
    %700 = vmatprep.subr.mxu0 0.0
    %701 = vmatpush1.msra.mxu0 0.0
    %702 = vmatprep.subr.mxu0 0.0
    %703 = vmatpush1.msra.mxu0 0.0
    %704 = vmatprep.subr.mxu0 0.0
    %705 = vmatpush1.msra.mxu0 0.0
    %706 = vmatprep.subr.mxu0 0.0
    %707 = vmatpush1.msra.mxu0 0.0
    %708 = vmatprep.subr.mxu0 0.0
    %709 = vmatpush1.msra.mxu0 0.0
    %710 = vmatprep.subr.mxu0 0.0
    %711 = vmatpush1.msra.mxu0 0.0
    %712 = vmatprep.mubr.f32.mxu0 0.0
    %713 = vmatmul.mubr.f32.gmra.mrb[0].mxu0 %v338
    %v714 = vpop.f32.mrb[0].mxu0
    %v715 = vadd.f32 0.0, %v714
    %v716 = vpop.f32.mrb[0].mxu0
    %717 = vmatprep.mubr.f32.mxu0 0.0
    %718 = vmatmul.mubr.f32.gmra.mrb[0].mxu0 %v339
    %v719 = vpop.f32.mrb[0].mxu0
    %v720 = vadd.f32 0.0, %v719
    %v721 = vpop.f32.mrb[0].mxu0
    %722 = vdwg.mxu0
    %v723 = vadd.f32 %v638, %v326
    %v724 = vadd.f32 %v640, %v330
    %v725 = vadd.f32 %v715, %v334
    %v726 = vadd.f32 %v644, %v326
    %v727 = vadd.f32 %v646, %v330
    %v728 = vadd.f32 %v720, %v334
    %v730 = vsel %vm237, %v87, 0
    %732 = vmatprep.subr.mxu0 %v561
    %733 = vmatpush1.msra.mxu0 %v486
    %734 = vmatprep.subr.mxu0 0.0
    %735 = vmatpush1.msra.mxu0 0.0
    %736 = vmatprep.subr.mxu0 0.0
    %737 = vmatpush1.msra.mxu0 0.0
    %738 = vmatprep.subr.mxu0 0.0
    %739 = vmatpush1.msra.mxu0 0.0
    %740 = vmatprep.subr.mxu0 0.0
    %741 = vmatpush1.msra.mxu0 0.0
    %742 = vmatprep.subr.mxu0 0.0
    %743 = vmatpush1.msra.mxu0 0.0
    %744 = vmatprep.subr.mxu0 0.0
    %745 = vmatpush1.msra.mxu0 0.0
    %746 = vmatprep.subr.mxu0 0.0
    %747 = vmatpush1.msra.mxu0 0.0
    %748 = vmatprep.subr.mxu0 0.0
    %749 = vmatpush1.msra.mxu0 0.0
    %750 = vmatprep.subr.mxu0 0.0
    %751 = vmatpush1.msra.mxu0 0.0
    %752 = vmatprep.subr.mxu0 0.0
    %753 = vmatpush1.msra.mxu0 0.0
    %754 = vmatprep.subr.mxu0 0.0
    %755 = vmatpush1.msra.mxu0 0.0
    %756 = vmatprep.subr.mxu0 0.0
    %757 = vmatpush1.msra.mxu0 0.0
    %758 = vmatprep.subr.mxu0 0.0
    %759 = vmatpush1.msra.mxu0 0.0
    %760 = vmatprep.subr.mxu0 0.0
    %761 = vmatpush1.msra.mxu0 0.0
    %762 = vmatprep.subr.mxu0 0.0
    %763 = vmatpush1.msra.mxu0 0.0
    %764 = vmatprep.subr.mxu0 0.0
    %765 = vmatpush1.msra.mxu0 0.0
    %766 = vmatprep.subr.mxu0 0.0
    %767 = vmatpush1.msra.mxu0 0.0
    %768 = vmatprep.subr.mxu0 0.0
    %769 = vmatpush1.msra.mxu0 0.0
    %770 = vmatprep.subr.mxu0 0.0
    %771 = vmatpush1.msra.mxu0 0.0
    %772 = vmatprep.subr.mxu0 0.0
    %773 = vmatpush1.msra.mxu0 0.0
    %774 = vmatprep.subr.mxu0 0.0
    %775 = vmatpush1.msra.mxu0 0.0
    %776 = vmatprep.subr.mxu0 0.0
    %777 = vmatpush1.msra.mxu0 0.0
    %778 = vmatprep.subr.mxu0 0.0
    %779 = vmatpush1.msra.mxu0 0.0
    %780 = vmatprep.subr.mxu0 0.0
    %781 = vmatpush1.msra.mxu0 0.0
    %782 = vmatprep.subr.mxu0 0.0
    %783 = vmatpush1.msra.mxu0 0.0
    %784 = vmatprep.subr.mxu0 0.0
    %785 = vmatpush1.msra.mxu0 0.0
    %786 = vmatprep.subr.mxu0 0.0
    %787 = vmatpush1.msra.mxu0 0.0
    %788 = vmatprep.subr.mxu0 0.0
    %789 = vmatpush1.msra.mxu0 0.0
    %790 = vmatprep.subr.mxu0 0.0
    %791 = vmatpush1.msra.mxu0 0.0
    %792 = vmatprep.subr.mxu0 0.0
    %793 = vmatpush1.msra.mxu0 0.0
    %794 = vmatprep.subr.mxu0 0.0
    %795 = vmatpush1.msra.mxu0 0.0
    %796 = vmatprep.mubr.f32.mxu0 0.0
    %797 = vmatmul.mubr.f32.gmra.mrb[0].mxu0 %v730
    %v798 = vpop.f32.mrb[0].mxu0
    %v799 = vadd.f32 0.0, %v798
    %v800 = vpop.f32.mrb[0].mxu0
    %v801 = vadd.f32 0.0, %v800
    %802 = vdwg.mxu0
    %803 = vmatprep.subr.mxu0 0.0
    %804 = vmatpush1.msra.mxu0 %v563
    %805 = vmatprep.subr.mxu0 0.0
    %806 = vmatpush1.msra.mxu0 0.0
    %807 = vmatprep.subr.mxu0 0.0
    %808 = vmatpush1.msra.mxu0 0.0
    %809 = vmatprep.subr.mxu0 0.0
    %810 = vmatpush1.msra.mxu0 0.0
    %811 = vmatprep.subr.mxu0 0.0
    %812 = vmatpush1.msra.mxu0 0.0
    %813 = vmatprep.subr.mxu0 0.0
    %814 = vmatpush1.msra.mxu0 0.0
    %815 = vmatprep.subr.mxu0 0.0
    %816 = vmatpush1.msra.mxu0 0.0
    %817 = vmatprep.subr.mxu0 0.0
    %818 = vmatpush1.msra.mxu0 0.0
    %819 = vmatprep.subr.mxu0 0.0
    %820 = vmatpush1.msra.mxu0 0.0
    %821 = vmatprep.subr.mxu0 0.0
    %822 = vmatpush1.msra.mxu0 0.0
    %823 = vmatprep.subr.mxu0 0.0
    %824 = vmatpush1.msra.mxu0 0.0
    %825 = vmatprep.subr.mxu0 0.0
    %826 = vmatpush1.msra.mxu0 0.0
    %827 = vmatprep.subr.mxu0 0.0
    %828 = vmatpush1.msra.mxu0 0.0
    %829 = vmatprep.subr.mxu0 0.0
    %830 = vmatpush1.msra.mxu0 0.0
    %831 = vmatprep.subr.mxu0 0.0
    %832 = vmatpush1.msra.mxu0 0.0
    %833 = vmatprep.subr.mxu0 0.0
    %834 = vmatpush1.msra.mxu0 0.0
    %835 = vmatprep.subr.mxu0 0.0
    %836 = vmatpush1.msra.mxu0 0.0
    %837 = vmatprep.subr.mxu0 0.0
    %838 = vmatpush1.msra.mxu0 0.0
    %839 = vmatprep.subr.mxu0 0.0
    %840 = vmatpush1.msra.mxu0 0.0
    %841 = vmatprep.subr.mxu0 0.0
    %842 = vmatpush1.msra.mxu0 0.0
    %843 = vmatprep.subr.mxu0 0.0
    %844 = vmatpush1.msra.mxu0 0.0
    %845 = vmatprep.subr.mxu0 0.0
    %846 = vmatpush1.msra.mxu0 0.0
    %847 = vmatprep.subr.mxu0 0.0
    %848 = vmatpush1.msra.mxu0 0.0
    %849 = vmatprep.subr.mxu0 0.0
    %850 = vmatpush1.msra.mxu0 0.0
    %851 = vmatprep.subr.mxu0 0.0
    %852 = vmatpush1.msra.mxu0 0.0
    %853 = vmatprep.subr.mxu0 0.0
    %854 = vmatpush1.msra.mxu0 0.0
    %855 = vmatprep.subr.mxu0 0.0
    %856 = vmatpush1.msra.mxu0 0.0
    %857 = vmatprep.subr.mxu0 0.0
    %858 = vmatpush1.msra.mxu0 0.0
    %859 = vmatprep.subr.mxu0 0.0
    %860 = vmatpush1.msra.mxu0 0.0
    %861 = vmatprep.subr.mxu0 0.0
    %862 = vmatpush1.msra.mxu0 0.0
    %863 = vmatprep.subr.mxu0 0.0
    %864 = vmatpush1.msra.mxu0 0.0
    %865 = vmatprep.subr.mxu0 0.0
    %866 = vmatpush1.msra.mxu0 0.0
    %867 = vmatprep.mubr.f32.mxu0 0.0
    %868 = vmatmul.mubr.f32.gmra.mrb[0].mxu0 %v730
    %v869 = vpop.f32.mrb[0].mxu0
    %v870 = vadd.f32 0.0, %v869
    %v871 = vpop.f32.mrb[0].mxu0
    %872 = vdwg.mxu0
    %v874 = vsel %vm237, %v88, 0
    %876 = vmatprep.subr.mxu0 %v567
    %877 = vmatpush1.msra.mxu0 %v492
    %878 = vmatprep.subr.mxu0 0.0
    %879 = vmatpush1.msra.mxu0 0.0
    %880 = vmatprep.subr.mxu0 0.0
    %881 = vmatpush1.msra.mxu0 0.0
    %882 = vmatprep.subr.mxu0 0.0
    %883 = vmatpush1.msra.mxu0 0.0
    %884 = vmatprep.subr.mxu0 0.0
    %885 = vmatpush1.msra.mxu0 0.0
    %886 = vmatprep.subr.mxu0 0.0
    %887 = vmatpush1.msra.mxu0 0.0
    %888 = vmatprep.subr.mxu0 0.0
    %889 = vmatpush1.msra.mxu0 0.0
    %890 = vmatprep.subr.mxu0 0.0
    %891 = vmatpush1.msra.mxu0 0.0
    %892 = vmatprep.subr.mxu0 0.0
    %893 = vmatpush1.msra.mxu0 0.0
    %894 = vmatprep.subr.mxu0 0.0
    %895 = vmatpush1.msra.mxu0 0.0
    %896 = vmatprep.subr.mxu0 0.0
    %897 = vmatpush1.msra.mxu0 0.0
    %898 = vmatprep.subr.mxu0 0.0
    %899 = vmatpush1.msra.mxu0 0.0
    %900 = vmatprep.subr.mxu0 0.0
    %901 = vmatpush1.msra.mxu0 0.0
    %902 = vmatprep.subr.mxu0 0.0
    %903 = vmatpush1.msra.mxu0 0.0
    %904 = vmatprep.subr.mxu0 0.0
    %905 = vmatpush1.msra.mxu0 0.0
    %906 = vmatprep.subr.mxu0 0.0
    %907 = vmatpush1.msra.mxu0 0.0
    %908 = vmatprep.subr.mxu0 0.0
    %909 = vmatpush1.msra.mxu0 0.0
    %910 = vmatprep.subr.mxu0 0.0
    %911 = vmatpush1.msra.mxu0 0.0
    %912 = vmatprep.subr.mxu0 0.0
    %913 = vmatpush1.msra.mxu0 0.0
    %914 = vmatprep.subr.mxu0 0.0
    %915 = vmatpush1.msra.mxu0 0.0
    %916 = vmatprep.subr.mxu0 0.0
    %917 = vmatpush1.msra.mxu0 0.0
    %918 = vmatprep.subr.mxu0 0.0
    %919 = vmatpush1.msra.mxu0 0.0
    %920 = vmatprep.subr.mxu0 0.0
    %921 = vmatpush1.msra.mxu0 0.0
    %922 = vmatprep.subr.mxu0 0.0
    %923 = vmatpush1.msra.mxu0 0.0
    %924 = vmatprep.subr.mxu0 0.0
    %925 = vmatpush1.msra.mxu0 0.0
    %926 = vmatprep.subr.mxu0 0.0
    %927 = vmatpush1.msra.mxu0 0.0
    %928 = vmatprep.subr.mxu0 0.0
    %929 = vmatpush1.msra.mxu0 0.0
    %930 = vmatprep.subr.mxu0 0.0
    %931 = vmatpush1.msra.mxu0 0.0
    %932 = vmatprep.subr.mxu0 0.0
    %933 = vmatpush1.msra.mxu0 0.0
    %934 = vmatprep.subr.mxu0 0.0
    %935 = vmatpush1.msra.mxu0 0.0
    %936 = vmatprep.subr.mxu0 0.0
    %937 = vmatpush1.msra.mxu0 0.0
    %938 = vmatprep.subr.mxu0 0.0
    %939 = vmatpush1.msra.mxu0 0.0
    %940 = vmatprep.mubr.f32.mxu0 0.0
    %941 = vmatmul.mubr.f32.gmra.mrb[0].mxu0 %v874
    %v942 = vpop.f32.mrb[0].mxu0
    %v943 = vadd.f32 0.0, %v942
    %v944 = vpop.f32.mrb[0].mxu0
    %v945 = vadd.f32 0.0, %v944
    %946 = vdwg.mxu0
    %947 = vmatprep.subr.mxu0 0.0
    %948 = vmatpush1.msra.mxu0 %v569
    %949 = vmatprep.subr.mxu0 0.0
    %950 = vmatpush1.msra.mxu0 0.0
    %951 = vmatprep.subr.mxu0 0.0
    %952 = vmatpush1.msra.mxu0 0.0
    %953 = vmatprep.subr.mxu0 0.0
    %954 = vmatpush1.msra.mxu0 0.0
    %955 = vmatprep.subr.mxu0 0.0
    %956 = vmatpush1.msra.mxu0 0.0
    %957 = vmatprep.subr.mxu0 0.0
    %958 = vmatpush1.msra.mxu0 0.0
    %959 = vmatprep.subr.mxu0 0.0
    %960 = vmatpush1.msra.mxu0 0.0
    %961 = vmatprep.subr.mxu0 0.0
    %962 = vmatpush1.msra.mxu0 0.0
    %963 = vmatprep.subr.mxu0 0.0
    %964 = vmatpush1.msra.mxu0 0.0
    %965 = vmatprep.subr.mxu0 0.0
    %966 = vmatpush1.msra.mxu0 0.0
    %967 = vmatprep.subr.mxu0 0.0
    %968 = vmatpush1.msra.mxu0 0.0
    %969 = vmatprep.subr.mxu0 0.0
    %970 = vmatpush1.msra.mxu0 0.0
    %971 = vmatprep.subr.mxu0 0.0
    %972 = vmatpush1.msra.mxu0 0.0
    %973 = vmatprep.subr.mxu0 0.0
    %974 = vmatpush1.msra.mxu0 0.0
    %975 = vmatprep.subr.mxu0 0.0
    %976 = vmatpush1.msra.mxu0 0.0
    %977 = vmatprep.subr.mxu0 0.0
    %978 = vmatpush1.msra.mxu0 0.0
    %979 = vmatprep.subr.mxu0 0.0
    %980 = vmatpush1.msra.mxu0 0.0
    %981 = vmatprep.subr.mxu0 0.0
    %982 = vmatpush1.msra.mxu0 0.0
    %983 = vmatprep.subr.mxu0 0.0
    %984 = vmatpush1.msra.mxu0 0.0
    %985 = vmatprep.subr.mxu0 0.0
    %986 = vmatpush1.msra.mxu0 0.0
    %987 = vmatprep.subr.mxu0 0.0
    %988 = vmatpush1.msra.mxu0 0.0
    %989 = vmatprep.subr.mxu0 0.0
    %990 = vmatpush1.msra.mxu0 0.0
    %991 = vmatprep.subr.mxu0 0.0
    %992 = vmatpush1.msra.mxu0 0.0
    %993 = vmatprep.subr.mxu0 0.0
    %994 = vmatpush1.msra.mxu0 0.0
    %995 = vmatprep.subr.mxu0 0.0
    %996 = vmatpush1.msra.mxu0 0.0
    %997 = vmatprep.subr.mxu0 0.0
    %998 = vmatpush1.msra.mxu0 0.0
    %999 = vmatprep.subr.mxu0 0.0
    %1000 = vmatpush1.msra.mxu0 0.0
    %1001 = vmatprep.subr.mxu0 0.0
    %1002 = vmatpush1.msra.mxu0 0.0
    %1003 = vmatprep.subr.mxu0 0.0
    %1004 = vmatpush1.msra.mxu0 0.0
    %1005 = vmatprep.subr.mxu0 0.0
    %1006 = vmatpush1.msra.mxu0 0.0
    %1007 = vmatprep.subr.mxu0 0.0
    %1008 = vmatpush1.msra.mxu0 0.0
    %1009 = vmatprep.subr.mxu0 0.0
    %1010 = vmatpush1.msra.mxu0 0.0
    %1011 = vmatprep.mubr.f32.mxu0 0.0
    %1012 = vmatmul.mubr.f32.gmra.mrb[0].mxu0 %v874
    %v1013 = vpop.f32.mrb[0].mxu0
    %v1014 = vadd.f32 0.0, %v1013
    %v1015 = vpop.f32.mrb[0].mxu0
    %1016 = vdwg.mxu0
    %v1018 = vsel %vm237, %v85, 0
    %1020 = vmatprep.subr.mxu0 %v409
    %1021 = vmatpush1.msra.mxu0 %v407
    %1022 = vmatprep.subr.mxu0 0.0
    %1023 = vmatpush1.msra.mxu0 0.0
    %1024 = vmatprep.subr.mxu0 0.0
    %1025 = vmatpush1.msra.mxu0 0.0
    %1026 = vmatprep.subr.mxu0 0.0
    %1027 = vmatpush1.msra.mxu0 0.0
    %1028 = vmatprep.subr.mxu0 0.0
    %1029 = vmatpush1.msra.mxu0 0.0
    %1030 = vmatprep.subr.mxu0 0.0
    %1031 = vmatpush1.msra.mxu0 0.0
    %1032 = vmatprep.subr.mxu0 0.0
    %1033 = vmatpush1.msra.mxu0 0.0
    %1034 = vmatprep.subr.mxu0 0.0
    %1035 = vmatpush1.msra.mxu0 0.0
    %1036 = vmatprep.subr.mxu0 0.0
    %1037 = vmatpush1.msra.mxu0 0.0
    %1038 = vmatprep.subr.mxu0 0.0
    %1039 = vmatpush1.msra.mxu0 0.0
    %1040 = vmatprep.subr.mxu0 0.0
    %1041 = vmatpush1.msra.mxu0 0.0
    %1042 = vmatprep.subr.mxu0 0.0
    %1043 = vmatpush1.msra.mxu0 0.0
    %1044 = vmatprep.subr.mxu0 0.0
    %1045 = vmatpush1.msra.mxu0 0.0
    %1046 = vmatprep.subr.mxu0 0.0
    %1047 = vmatpush1.msra.mxu0 0.0
    %1048 = vmatprep.subr.mxu0 0.0
    %1049 = vmatpush1.msra.mxu0 0.0
    %1050 = vmatprep.subr.mxu0 0.0
    %1051 = vmatpush1.msra.mxu0 0.0
    %1052 = vmatprep.subr.mxu0 0.0
    %1053 = vmatpush1.msra.mxu0 0.0
    %1054 = vmatprep.subr.mxu0 0.0
    %1055 = vmatpush1.msra.mxu0 0.0
    %1056 = vmatprep.subr.mxu0 0.0
    %1057 = vmatpush1.msra.mxu0 0.0
    %1058 = vmatprep.subr.mxu0 0.0
    %1059 = vmatpush1.msra.mxu0 0.0
    %1060 = vmatprep.subr.mxu0 0.0
    %1061 = vmatpush1.msra.mxu0 0.0
    %1062 = vmatprep.subr.mxu0 0.0
    %1063 = vmatpush1.msra.mxu0 0.0
    %1064 = vmatprep.subr.mxu0 0.0
    %1065 = vmatpush1.msra.mxu0 0.0
    %1066 = vmatprep.subr.mxu0 0.0
    %1067 = vmatpush1.msra.mxu0 0.0
    %1068 = vmatprep.subr.mxu0 0.0
    %1069 = vmatpush1.msra.mxu0 0.0
    %1070 = vmatprep.subr.mxu0 0.0
    %1071 = vmatpush1.msra.mxu0 0.0
    %1072 = vmatprep.subr.mxu0 0.0
    %1073 = vmatpush1.msra.mxu0 0.0
    %1074 = vmatprep.subr.mxu0 0.0
    %1075 = vmatpush1.msra.mxu0 0.0
    %1076 = vmatprep.subr.mxu0 0.0
    %1077 = vmatpush1.msra.mxu0 0.0
    %1078 = vmatprep.subr.mxu0 0.0
    %1079 = vmatpush1.msra.mxu0 0.0
    %1080 = vmatprep.subr.mxu0 0.0
    %1081 = vmatpush1.msra.mxu0 0.0
    %1082 = vmatprep.subr.mxu0 0.0
    %1083 = vmatpush1.msra.mxu0 0.0
    %1084 = vmatprep.mubr.f32.mxu0 0.0
    %1085 = vmatmul.mubr.f32.gmra.mrb[0].mxu0 %v1018
    %v1086 = vpop.f32.mrb[0].mxu0
    %v1087 = vadd.f32 %v799, %v1086
    %v1088 = vpop.f32.mrb[0].mxu0
    %v1089 = vadd.f32 %v801, %v1088
    %1090 = vdwg.mxu0
    %1091 = vmatprep.subr.mxu0 0.0
    %1092 = vmatpush1.msra.mxu0 %v484
    %1093 = vmatprep.subr.mxu0 0.0
    %1094 = vmatpush1.msra.mxu0 0.0
    %1095 = vmatprep.subr.mxu0 0.0
    %1096 = vmatpush1.msra.mxu0 0.0
    %1097 = vmatprep.subr.mxu0 0.0
    %1098 = vmatpush1.msra.mxu0 0.0
    %1099 = vmatprep.subr.mxu0 0.0
    %1100 = vmatpush1.msra.mxu0 0.0
    %1101 = vmatprep.subr.mxu0 0.0
    %1102 = vmatpush1.msra.mxu0 0.0
    %1103 = vmatprep.subr.mxu0 0.0
    %1104 = vmatpush1.msra.mxu0 0.0
    %1105 = vmatprep.subr.mxu0 0.0
    %1106 = vmatpush1.msra.mxu0 0.0
    %1107 = vmatprep.subr.mxu0 0.0
    %1108 = vmatpush1.msra.mxu0 0.0
    %1109 = vmatprep.subr.mxu0 0.0
    %1110 = vmatpush1.msra.mxu0 0.0
    %1111 = vmatprep.subr.mxu0 0.0
    %1112 = vmatpush1.msra.mxu0 0.0
    %1113 = vmatprep.subr.mxu0 0.0
    %1114 = vmatpush1.msra.mxu0 0.0
    %1115 = vmatprep.subr.mxu0 0.0
    %1116 = vmatpush1.msra.mxu0 0.0
    %1117 = vmatprep.subr.mxu0 0.0
    %1118 = vmatpush1.msra.mxu0 0.0
    %1119 = vmatprep.subr.mxu0 0.0
    %1120 = vmatpush1.msra.mxu0 0.0
    %1121 = vmatprep.subr.mxu0 0.0
    %1122 = vmatpush1.msra.mxu0 0.0
    %1123 = vmatprep.subr.mxu0 0.0
    %1124 = vmatpush1.msra.mxu0 0.0
    %1125 = vmatprep.subr.mxu0 0.0
    %1126 = vmatpush1.msra.mxu0 0.0
    %1127 = vmatprep.subr.mxu0 0.0
    %1128 = vmatpush1.msra.mxu0 0.0
    %1129 = vmatprep.subr.mxu0 0.0
    %1130 = vmatpush1.msra.mxu0 0.0
    %1131 = vmatprep.subr.mxu0 0.0
    %1132 = vmatpush1.msra.mxu0 0.0
    %1133 = vmatprep.subr.mxu0 0.0
    %1134 = vmatpush1.msra.mxu0 0.0
    %1135 = vmatprep.subr.mxu0 0.0
    %1136 = vmatpush1.msra.mxu0 0.0
    %1137 = vmatprep.subr.mxu0 0.0
    %1138 = vmatpush1.msra.mxu0 0.0
    %1139 = vmatprep.subr.mxu0 0.0
    %1140 = vmatpush1.msra.mxu0 0.0
    %1141 = vmatprep.subr.mxu0 0.0
    %1142 = vmatpush1.msra.mxu0 0.0
    %1143 = vmatprep.subr.mxu0 0.0
    %1144 = vmatpush1.msra.mxu0 0.0
    %1145 = vmatprep.subr.mxu0 0.0
    %1146 = vmatpush1.msra.mxu0 0.0
    %1147 = vmatprep.subr.mxu0 0.0
    %1148 = vmatpush1.msra.mxu0 0.0
    %1149 = vmatprep.subr.mxu0 0.0
    %1150 = vmatpush1.msra.mxu0 0.0
    %1151 = vmatprep.subr.mxu0 0.0
    %1152 = vmatpush1.msra.mxu0 0.0
    %1153 = vmatprep.subr.mxu0 0.0
    %1154 = vmatpush1.msra.mxu0 0.0
    %1155 = vmatprep.mubr.f32.mxu0 0.0
    %1156 = vmatmul.mubr.f32.gmra.mrb[0].mxu0 %v1018
    %v1157 = vpop.f32.mrb[0].mxu0
    %v1158 = vadd.f32 %v870, %v1157
    %v1159 = vpop.f32.mrb[0].mxu0
    %1160 = vdwg.mxu0
    %v1162 = vsel %vm237, %v86, 0
    %1164 = vmatprep.subr.mxu0 %v415
    %1165 = vmatpush1.msra.mxu0 %v413
    %1166 = vmatprep.subr.mxu0 0.0
    %1167 = vmatpush1.msra.mxu0 0.0
    %1168 = vmatprep.subr.mxu0 0.0
    %1169 = vmatpush1.msra.mxu0 0.0
    %1170 = vmatprep.subr.mxu0 0.0
    %1171 = vmatpush1.msra.mxu0 0.0
    %1172 = vmatprep.subr.mxu0 0.0
    %1173 = vmatpush1.msra.mxu0 0.0
    %1174 = vmatprep.subr.mxu0 0.0
    %1175 = vmatpush1.msra.mxu0 0.0
    %1176 = vmatprep.subr.mxu0 0.0
    %1177 = vmatpush1.msra.mxu0 0.0
    %1178 = vmatprep.subr.mxu0 0.0
    %1179 = vmatpush1.msra.mxu0 0.0
    %1180 = vmatprep.subr.mxu0 0.0
    %1181 = vmatpush1.msra.mxu0 0.0
    %1182 = vmatprep.subr.mxu0 0.0
    %1183 = vmatpush1.msra.mxu0 0.0
    %1184 = vmatprep.subr.mxu0 0.0
    %1185 = vmatpush1.msra.mxu0 0.0
    %1186 = vmatprep.subr.mxu0 0.0
    %1187 = vmatpush1.msra.mxu0 0.0
    %1188 = vmatprep.subr.mxu0 0.0
    %1189 = vmatpush1.msra.mxu0 0.0
    %1190 = vmatprep.subr.mxu0 0.0
    %1191 = vmatpush1.msra.mxu0 0.0
    %1192 = vmatprep.subr.mxu0 0.0
    %1193 = vmatpush1.msra.mxu0 0.0
    %1194 = vmatprep.subr.mxu0 0.0
    %1195 = vmatpush1.msra.mxu0 0.0
    %1196 = vmatprep.subr.mxu0 0.0
    %1197 = vmatpush1.msra.mxu0 0.0
    %1198 = vmatprep.subr.mxu0 0.0
    %1199 = vmatpush1.msra.mxu0 0.0
    %1200 = vmatprep.subr.mxu0 0.0
    %1201 = vmatpush1.msra.mxu0 0.0
    %1202 = vmatprep.subr.mxu0 0.0
    %1203 = vmatpush1.msra.mxu0 0.0
    %1204 = vmatprep.subr.mxu0 0.0
    %1205 = vmatpush1.msra.mxu0 0.0
    %1206 = vmatprep.subr.mxu0 0.0
    %1207 = vmatpush1.msra.mxu0 0.0
    %1208 = vmatprep.subr.mxu0 0.0
    %1209 = vmatpush1.msra.mxu0 0.0
    %1210 = vmatprep.subr.mxu0 0.0
    %1211 = vmatpush1.msra.mxu0 0.0
    %1212 = vmatprep.subr.mxu0 0.0
    %1213 = vmatpush1.msra.mxu0 0.0
    %1214 = vmatprep.subr.mxu0 0.0
    %1215 = vmatpush1.msra.mxu0 0.0
    %1216 = vmatprep.subr.mxu0 0.0
    %1217 = vmatpush1.msra.mxu0 0.0
    %1218 = vmatprep.subr.mxu0 0.0
    %1219 = vmatpush1.msra.mxu0 0.0
    %1220 = vmatprep.subr.mxu0 0.0
    %1221 = vmatpush1.msra.mxu0 0.0
    %1222 = vmatprep.subr.mxu0 0.0
    %1223 = vmatpush1.msra.mxu0 0.0
    %1224 = vmatprep.subr.mxu0 0.0
    %1225 = vmatpush1.msra.mxu0 0.0
    %1226 = vmatprep.subr.mxu0 0.0
    %1227 = vmatpush1.msra.mxu0 0.0
    %1228 = vmatprep.mubr.f32.mxu0 0.0
    %1229 = vmatmul.mubr.f32.gmra.mrb[0].mxu0 %v1162
    %v1230 = vpop.f32.mrb[0].mxu0
    %v1231 = vadd.f32 %v943, %v1230
    %v1232 = vpop.f32.mrb[0].mxu0
    %v1233 = vadd.f32 %v945, %v1232
    %1234 = vdwg.mxu0
    %1235 = vmatprep.subr.mxu0 0.0
    %1236 = vmatpush1.msra.mxu0 %v490
    %1237 = vmatprep.subr.mxu0 0.0
    %1238 = vmatpush1.msra.mxu0 0.0
    %1239 = vmatprep.subr.mxu0 0.0
    %1240 = vmatpush1.msra.mxu0 0.0
    %1241 = vmatprep.subr.mxu0 0.0
    %1242 = vmatpush1.msra.mxu0 0.0
    %1243 = vmatprep.subr.mxu0 0.0
    %1244 = vmatpush1.msra.mxu0 0.0
    %1245 = vmatprep.subr.mxu0 0.0
    %1246 = vmatpush1.msra.mxu0 0.0
    %1247 = vmatprep.subr.mxu0 0.0
    %1248 = vmatpush1.msra.mxu0 0.0
    %1249 = vmatprep.subr.mxu0 0.0
    %1250 = vmatpush1.msra.mxu0 0.0
    %1251 = vmatprep.subr.mxu0 0.0
    %1252 = vmatpush1.msra.mxu0 0.0
    %1253 = vmatprep.subr.mxu0 0.0
    %1254 = vmatpush1.msra.mxu0 0.0
    %1255 = vmatprep.subr.mxu0 0.0
    %1256 = vmatpush1.msra.mxu0 0.0
    %1257 = vmatprep.subr.mxu0 0.0
    %1258 = vmatpush1.msra.mxu0 0.0
    %1259 = vmatprep.subr.mxu0 0.0
    %1260 = vmatpush1.msra.mxu0 0.0
    %1261 = vmatprep.subr.mxu0 0.0
    %1262 = vmatpush1.msra.mxu0 0.0
    %1263 = vmatprep.subr.mxu0 0.0
    %1264 = vmatpush1.msra.mxu0 0.0
    %1265 = vmatprep.subr.mxu0 0.0
    %1266 = vmatpush1.msra.mxu0 0.0
    %1267 = vmatprep.subr.mxu0 0.0
    %1268 = vmatpush1.msra.mxu0 0.0
    %1269 = vmatprep.subr.mxu0 0.0
    %1270 = vmatpush1.msra.mxu0 0.0
    %1271 = vmatprep.subr.mxu0 0.0
    %1272 = vmatpush1.msra.mxu0 0.0
    %1273 = vmatprep.subr.mxu0 0.0
    %1274 = vmatpush1.msra.mxu0 0.0
    %1275 = vmatprep.subr.mxu0 0.0
    %1276 = vmatpush1.msra.mxu0 0.0
    %1277 = vmatprep.subr.mxu0 0.0
    %1278 = vmatpush1.msra.mxu0 0.0
    %1279 = vmatprep.subr.mxu0 0.0
    %1280 = vmatpush1.msra.mxu0 0.0
    %1281 = vmatprep.subr.mxu0 0.0
    %1282 = vmatpush1.msra.mxu0 0.0
    %1283 = vmatprep.subr.mxu0 0.0
    %1284 = vmatpush1.msra.mxu0 0.0
    %1285 = vmatprep.subr.mxu0 0.0
    %1286 = vmatpush1.msra.mxu0 0.0
    %1287 = vmatprep.subr.mxu0 0.0
    %1288 = vmatpush1.msra.mxu0 0.0
    %1289 = vmatprep.subr.mxu0 0.0
    %1290 = vmatpush1.msra.mxu0 0.0
    %1291 = vmatprep.subr.mxu0 0.0
    %1292 = vmatpush1.msra.mxu0 0.0
    %1293 = vmatprep.subr.mxu0 0.0
    %1294 = vmatpush1.msra.mxu0 0.0
    %1295 = vmatprep.subr.mxu0 0.0
    %1296 = vmatpush1.msra.mxu0 0.0
    %1297 = vmatprep.subr.mxu0 0.0
    %1298 = vmatpush1.msra.mxu0 0.0
    %1299 = vmatprep.mubr.f32.mxu0 0.0
    %1300 = vmatmul.mubr.f32.gmra.mrb[0].mxu0 %v1162
    %v1301 = vpop.f32.mrb[0].mxu0
    %v1302 = vadd.f32 %v1014, %v1301
    %v1303 = vpop.f32.mrb[0].mxu0
    %1304 = vdwg.mxu0
    %v1305 = vadd.f32 %v1087, %v316
    %v1306 = vadd.f32 %v1089, %v317
    %v1307 = vadd.f32 %v1158, %v318
    %v1308 = vadd.f32 %v1231, %v319
    %v1309 = vadd.f32 %v1233, %v320
    %v1310 = vadd.f32 %v1302, %v321
    %v1311 = vadd.f32 %v1305, %v723
    %v1312 = vadd.f32 %v1308, %v726
    %v1313 = vxor.u32 %v1311, 2147483648
    %v1314 = vxor.u32 %v1312, 2147483648
    %v1315 = vmul.f32 %v1313, 1.442695
    %v1316 = vpow.pop %v1315
    %v1317 = vmul.f32 %v1314, 1.442695
    %v1318 = vpow.pop %v1317
    %v1319 = vadd.f32 %v1316, 1.0
    %v1320 = vadd.f32 %v1318, 1.0
    %v1321 = vrcp.pop %v1319
    %v1322 = vmul.f32 1.0, %v1321
    %v1323 = vrcp.pop %v1320
    %v1324 = vmul.f32 1.0, %v1323
    %v1325 = vadd.f32 %v1306, %v724
    %v1326 = vadd.f32 %v1309, %v727
    %v1327 = vxor.u32 %v1325, 2147483648
    %v1328 = vxor.u32 %v1326, 2147483648
    %v1329 = vmul.f32 %v1327, 1.442695
    %v1330 = vpow.pop %v1329
    %v1331 = vmul.f32 %v1328, 1.442695
    %v1332 = vpow.pop %v1331
    %v1333 = vadd.f32 %v1330, 1.0
    %v1334 = vadd.f32 %v1332, 1.0
    %v1335 = vrcp.pop %v1333
    %v1336 = vmul.f32 1.0, %v1335
    %v1337 = vrcp.pop %v1334
    %v1338 = vmul.f32 1.0, %v1337
    %v1339 = vmul.f32 %v1322, %v725
    %v1340 = vmul.f32 %v1324, %v728
    %v1341 = vadd.f32 %v1307, %v1339
    %v1342 = vadd.f32 %v1310, %v1340
    %v1343 = vtanh.pop %v1341
    %v1344 = vtanh.pop %v1342
    %v1345 = vsub.f32 1.0, %v1336
    %v1346 = vsub.f32 1.0, %v1338
    %v1347 = vmul.f32 %v1345, %v338
    %v1348 = vmul.f32 %v1346, %v339
    %v1349 = vmul.f32 %v1336, %v1343
    %v1350 = vmul.f32 %v1338, %v1344
    %v1351 = vadd.f32 %v1347, %v1349
    %v1352 = vadd.f32 %v1348, %v1350
    %1353 = vst [vmem:[#allocation10] sm:$0xff] %v1351
    %1354 = vst [vmem:[#allocation10 + $0x8] sm:$0xff] %v1352
    // Predicated region
    $region50: #{tpu_custom_call.1} parent=1 // pred_check
      _
    $region51: #{tpu_custom_call.1} parent=1 // pred_check_branch
      %1356 = sbr.rel (0) target = $region53
    $region52: #{tpu_custom_call.1} parent=1 // pred_region
      %s1358 = ssub.s32 256, 256
      %1359 = vsyncadd [#allocation4], %s1358
      %s1360 = sshll.u32 [#allocation10], 4
      %s1361 = int_to_ptr.vmem [resolvable:$true] %s1360
      %1366 = dma.vmem_to_hbm [thread:$0]  %s1361, 256, %s8, [#allocation4], 128, 128, 8
    $region53: #{tpu_custom_call.1} parent=1 // pred_fallthru
      _
    // Predicated region
    $region54: #{tpu_custom_call.1} parent=1 // pred_check
      _
    $region55: #{tpu_custom_call.1} parent=1 // pred_check_branch
      %1368 = sbr.rel (0) target = $region57
    $region56: #{tpu_custom_call.1} parent=1 // pred_region
      %1369 = dma.done [#allocation4], 256
    $region57: #{tpu_custom_call.1} parent=1 // pred_fallthru
      _
    %1370 = vsyncpa [#allocation3], 1
    %1371 = vsyncpa [#allocation6], 1
    %1372 = vsyncpa [#allocation9], 1
    %1373 = vsyncpa [#allocation4], 1

</llo_original>
